<compile_context>
chip_gen: v6e
topology: v6e:2x2x1
jax: 0.10.0
libtpu: 0.0.40
codegen_flags: <defaults>
</compile_context>

<pallas_src>
import functools

import jax
import jax.numpy as jnp
from jax.experimental import pallas as pl
from jax.experimental.pallas import tpu as pltpu


def _round_up(x, m):
    return (x + m - 1) // m * m


def _lstm_recurrence_kernel(gx_ref, w_hh_hbm, h_ref, w_hh_vmem, c_ref, sem,
                            *, Hp, Tc):
    """One grid step = Tc LSTM timesteps for one batch tile.

    gx_ref    : (Tc, Bt, 4*Hp) precomputed x@W_ih^T + bias, gate order (i,f,o,g)
    w_hh_hbm  : (Hp, 4*Hp)     recurrent weight, raw HBM ref (pl.ANY)
    h_ref     : (Bt, Hp)       output block; doubles as the resident h state
    w_hh_vmem : (Hp, 4*Hp)     single-buffered VMEM copy of W_hh
    c_ref     : (Bt, Hp)       cell-state scratch
    sem       : DMA semaphore for the one-time W_hh staging copy
    """
    t_chunk = pl.program_id(1)

    @pl.when(t_chunk == 0)
    def _():
        # Stage the grid-invariant recurrent weight into VMEM exactly once per
        # batch tile (single-buffered; default pipelining would double-buffer).
        cp = pltpu.make_async_copy(w_hh_hbm, w_hh_vmem, sem)
        cp.start()
        cp.wait()
        h_ref[...] = jnp.zeros_like(h_ref)
        c_ref[...] = jnp.zeros_like(c_ref)

    w_hh = w_hh_vmem[...]

    h = h_ref[...]
    c = c_ref[...]
    # Fully unrolled chunk (static trip count) -> straight-line code; only the
    # small (Bt,Hp)x(Hp,4Hp) matmul sits on the serial critical path.
    for i in range(Tc):
        gates = gx_ref[i] + jnp.dot(h, w_hh, preferred_element_type=jnp.float32)
        # Gate order (i, f, o, g): one fused sigmoid over a lane-aligned 3*Hp
        # slab, tanh over the last Hp lanes.
        sig = jax.nn.sigmoid(gates[:, :3 * Hp])
        i_g = sig[:, 0 * Hp:1 * Hp]
        f_g = sig[:, 1 * Hp:2 * Hp]
        o_g = sig[:, 2 * Hp:3 * Hp]
        g_g = jnp.tanh(gates[:, 3 * Hp:])
        c = f_g * c + i_g * g_g
        h = o_g * jnp.tanh(c)

    h_ref[...] = h
    c_ref[...] = c


def lstm_predictor_forward(x, params, *, time_chunk=16, batch_tile=None):
    """x: (B, T, D) float32 (PyTorch batch_first layout). Returns (B, O)."""
    w_ih, w_hh, b_ih, b_hh, w_fc, b_fc = (
        params["w_ih"], params["w_hh"], params["b_ih"], params["b_hh"],
        params["w_fc"], params["b_fc"])
    B, T, D = x.shape
    H = w_hh.shape[1]          # w_hh: (4H, H)

    LANE, SUB = 128, 8
    Hp = _round_up(H, LANE)                    # lane-pad each gate
    Bp = _round_up(B, SUB)                     # sublane-pad the batch
    Bt = Bp if batch_tile is None else min(_round_up(batch_tile, SUB), Bp)
    Bp = _round_up(Bp, Bt)
    Tc = max(1, min(time_chunk, T))            # timesteps per grid step
    Tp = _round_up(T, Tc)

    # Reorder gates from torch (i, f, g, o) to (i, f, o, g) and pad each gate
    # block to Hp lanes.  Wrapper-only transform; semantics unchanged.
    perm = jnp.array([0, 1, 3, 2])

    def pack_gates(w):                          # (4H, X) -> (4Hp, X)
        X = w.shape[1]
        wg = w.reshape(4, H, X)[perm]
        wg = jnp.pad(wg, ((0, 0), (0, Hp - H), (0, 0)))
        return wg.reshape(4 * Hp, X)

    w_ih_p = pack_gates(w_ih)                                    # (4Hp, D)
    w_hh_p = jnp.pad(pack_gates(w_hh), ((0, 0), (0, Hp - H)))    # (4Hp, Hp)
    w_hh_t = jnp.transpose(w_hh_p)                               # (Hp, 4Hp)
    bias = b_ih + b_hh
    bias_p = jnp.pad(bias.reshape(4, H)[perm],
                     ((0, 0), (0, Hp - H))).reshape(4 * Hp)      # (4Hp,)

    # Hoisted input projection: one MXU-shaped matmul over all T timesteps,
    # produced directly in time-major layout.
    prec = jax.lax.Precision.HIGHEST
    gx = jnp.einsum('btd,gd->tbg', x, w_ih_p, precision=prec) + bias_p
    # Front-pad time with zeros (a zero pre-activation step maps (0,0)->(0,0),
    # so no in-kernel masking is needed); pad batch to the sublane multiple.
    gx = jnp.pad(gx, ((Tp - T, 0), (0, Bp - B), (0, 0))).astype(jnp.float32)

    n_btiles = Bp // Bt
    n_tchunks = Tp // Tc

    # Size the scoped VMEM limit from actual buffers (clamped to be safe on
    # v5e/v6e/v7x); at production H, re-derive this against the 64 MiB v7x cap.
    vmem_needed = (2 * Tc * Bt * 4 * Hp * 4      # gx stream (double-buffered)
                   + Hp * 4 * Hp * 4             # W_hh (single-buffered)
                   + 4 * Bt * Hp * 4)            # h output block + c scratch
    vmem_limit = int(min(64 * 2 ** 20, max(16 * 2 ** 20, 2 * vmem_needed)))

    kernel = functools.partial(_lstm_recurrence_kernel, Hp=Hp, Tc=Tc)

    h_n = pl.pallas_call(
        kernel,
        out_shape=jax.ShapeDtypeStruct((Bp, Hp), jnp.float32),
        grid_spec=pltpu.PrefetchScalarGridSpec(
            num_scalar_prefetch=0,
            grid=(n_btiles, n_tchunks),
            in_specs=[
                pl.BlockSpec((Tc, Bt, 4 * Hp), lambda bi, ti: (ti, bi, 0)),
                pl.BlockSpec(memory_space=pl.ANY),   # W_hh stays in HBM
            ],
            out_specs=pl.BlockSpec((Bt, Hp), lambda bi, ti: (bi, 0)),
            scratch_shapes=[
                pltpu.VMEM((Hp, 4 * Hp), jnp.float32),   # staged W_hh
                pltpu.VMEM((Bt, Hp), jnp.float32),       # cell state c
                pltpu.SemaphoreType.DMA,                 # W_hh staging copy
            ],
        ),
        compiler_params=pltpu.CompilerParams(
            dimension_semantics=("parallel", "arbitrary"),
            vmem_limit_bytes=vmem_limit),
    )(gx, w_hh_t)

    # Final FC on h_n (== h_n.squeeze() for B > 1) stays in XLA: tiny, used
    # once, and keeping W_fc out of VMEM for the whole sequence.
    h_last = h_n[:B, :H]
    return h_last @ w_fc.T + b_fc


def _reference_forward(x, params):
    """Pure-JAX reference matching torch semantics (gate order i, f, g, o)."""
    w_ih, w_hh, b_ih, b_hh, w_fc, b_fc = (
        params["w_ih"], params["w_hh"], params["b_ih"], params["b_hh"],
        params["w_fc"], params["b_fc"])
    B, T, D = x.shape
    H = w_hh.shape[1]

    def step(carry, x_t):
        h, c = carry
        gates = x_t @ w_ih.T + h @ w_hh.T + b_ih + b_hh
        i = jax.nn.sigmoid(gates[:, 0 * H:1 * H])
        f = jax.nn.sigmoid(gates[:, 1 * H:2 * H])
        g = jnp.tanh(gates[:, 2 * H:3 * H])
        o = jax.nn.sigmoid(gates[:, 3 * H:4 * H])
        c = f * c + i * g
        h = o * jnp.tanh(c)
        return (h, c), None

    h0 = jnp.zeros((B, H), jnp.float32)
    c0 = jnp.zeros((B, H), jnp.float32)
    (h_n, _), _ = jax.lax.scan(step, (h0, c0), jnp.transpose(x, (1, 0, 2)))
    return h_n @ w_fc.T + b_fc


def init_params(key, input_dim, hidden_dim, output_dim):
    ks = jax.random.split(key, 6)
    s = 1.0 / jnp.sqrt(hidden_dim)
    return {
        "w_ih": jax.random.uniform(ks[0], (4 * hidden_dim, input_dim),
                                   jnp.float32, -s, s),
        "w_hh": jax.random.uniform(ks[1], (4 * hidden_dim, hidden_dim),
                                   jnp.float32, -s, s),
        "b_ih": jax.random.uniform(ks[2], (4 * hidden_dim,),
                                   jnp.float32, -s, s),
        "b_hh": jax.random.uniform(ks[3], (4 * hidden_dim,),
                                   jnp.float32, -s, s),
        "w_fc": jax.random.uniform(ks[4], (output_dim, hidden_dim),
                                   jnp.float32, -s, s),
        "b_fc": jax.random.uniform(ks[5], (output_dim,),
                                   jnp.float32, -s, s),
    }


if __name__ == "__main__":
    B, T, D, H, O = 2, 8, 16, 32, 8
    key = jax.random.PRNGKey(0)
    k_x, k_p = jax.random.split(key)
    x = jax.random.normal(k_x, (B, T, D), jnp.float32)
    params = init_params(k_p, D, H, O)

    out = lstm_predictor_forward(x, params)
    out = jax.block_until_ready(out)

    ref = _reference_forward(x, params)
    assert out.shape == (B, O)
    assert jnp.allclose(out, ref, atol=1e-5, rtol=1e-5), (
        float(jnp.max(jnp.abs(out - ref))))
    print("KERNEL_OK")
</pallas_src>

<mosaic_0001>
module attributes {stable_mosaic.version = 11 : i64} {
  func.func @_lstm_recurrence_kernel(%arg0: i32, %arg1: i32, %arg2: memref<8x8x512xf32, #tpu.memory_space<vmem>>, %arg3: memref<128x512xf32, #tpu.memory_space<any>>, %arg4: memref<8x128xf32, #tpu.memory_space<vmem>>, %arg5: memref<128x512xf32, #tpu.memory_space<vmem>>, %arg6: memref<8x128xf32, #tpu.memory_space<vmem>>, %arg7: memref<!tpu.dma_semaphore, #tpu.memory_space<semaphore_mem>>) attributes {dimension_semantics = [#tpu.dimension_semantics<parallel>, #tpu.dimension_semantics<arbitrary>], iteration_bounds = array<i64: 1, 1>, scalar_prefetch = 0 : i64, scratch_operands = 3 : i64, tpu.core_type = #tpu.core_type<tc>, window_params = [{transform_indices = @transform_0, window_bounds = array<i64: 8, 8, 512>}, {}, {transform_indices = @transform_2, window_bounds = array<i64: 8, 128>}]} {
    %c0_i32 = arith.constant 0 : i32
    %0 = arith.cmpi eq, %arg1, %c0_i32 : i32
    %1 = arith.extui %0 : i1 to i32
    %c0_i32_0 = arith.constant 0 : i32
    %2 = arith.cmpi ne, %1, %c0_i32_0 : i32
    scf.if %2 {
      tpu.enqueue_dma source(%arg3 : memref<128x512xf32, #tpu.memory_space<any>>) target(%arg5 : memref<128x512xf32, #tpu.memory_space<vmem>>) target_semaphore(%arg7 : memref<!tpu.dma_semaphore, #tpu.memory_space<semaphore_mem>>)
      tpu.wait_dma2 semaphore(%arg7 : memref<!tpu.dma_semaphore, #tpu.memory_space<semaphore_mem>>) src(%arg3 : memref<128x512xf32, #tpu.memory_space<any>>) dst(%arg5 : memref<128x512xf32, #tpu.memory_space<vmem>>)
      %cst_42 = arith.constant 0.000000e+00 : f32
      %168 = vector.broadcast %cst_42 : f32 to vector<8x128xf32>
      %c0_43 = arith.constant 0 : index
      %c0_44 = arith.constant 0 : index
      %169 = vector.load %arg4[%c0_43, %c0_44] : memref<8x128xf32, #tpu.memory_space<vmem>>, vector<8x128xf32>
      tpu.vector_store %arg4[%c0_43, %c0_44], %168 {strides = array<i32>} : memref<8x128xf32, #tpu.memory_space<vmem>>, vector<8x128xf32>,
      %cst_45 = arith.constant 0.000000e+00 : f32
      %170 = vector.broadcast %cst_45 : f32 to vector<8x128xf32>
      %c0_46 = arith.constant 0 : index
      %c0_47 = arith.constant 0 : index
      %171 = vector.load %arg6[%c0_46, %c0_47] : memref<8x128xf32, #tpu.memory_space<vmem>>, vector<8x128xf32>
      tpu.vector_store %arg6[%c0_46, %c0_47], %170 {strides = array<i32>} : memref<8x128xf32, #tpu.memory_space<vmem>>, vector<8x128xf32>,
    } else {
    }
    %c0 = arith.constant 0 : index
    %c0_1 = arith.constant 0 : index
    %3 = vector.load %arg5[%c0, %c0_1] : memref<128x512xf32, #tpu.memory_space<vmem>>, vector<128x512xf32>
    %c0_2 = arith.constant 0 : index
    %c0_3 = arith.constant 0 : index
    %4 = vector.load %arg4[%c0_2, %c0_3] : memref<8x128xf32, #tpu.memory_space<vmem>>, vector<8x128xf32>
    %c0_4 = arith.constant 0 : index
    %c0_5 = arith.constant 0 : index
    %5 = vector.load %arg6[%c0_4, %c0_5] : memref<8x128xf32, #tpu.memory_space<vmem>>, vector<8x128xf32>
    %c0_6 = arith.constant 0 : index
    %c0_7 = arith.constant 0 : index
    %c0_8 = arith.constant 0 : index
    %6 = vector.load %arg2[%c0_6, %c0_7, %c0_8] : memref<8x8x512xf32, #tpu.memory_space<vmem>>, vector<1x8x512xf32>
    %7 = vector.shape_cast %6 : vector<1x8x512xf32> to vector<8x512xf32>
    %cst = arith.constant dense<0.000000e+00> : vector<8x512xf32>
    %8 = tpu.matmul %4, %3, %cst {dimension_numbers = #tpu.dot_dimension_numbers<[1], [0], [0], [1], [0, 0, 1, 1], [], []>} : vector<8x128xf32>, vector<128x512xf32>, vector<8x512xf32> -> vector<8x512xf32>
    %9 = arith.addf %7, %8 : vector<8x512xf32>
    %10 = vector.extract_strided_slice %9 {offsets = [0, 0], sizes = [8, 384], strides = [1, 1]} : vector<8x512xf32> to vector<8x384xf32>
    %11 = arith.negf %10 : vector<8x384xf32>
    %12 = math.exp %11 : vector<8x384xf32>
    %cst_9 = arith.constant 1.000000e+00 : f32
    %13 = vector.broadcast %cst_9 : f32 to vector<8x384xf32>
    %14 = arith.addf %13, %12 : vector<8x384xf32>
    %15 = arith.divf %13, %14 : vector<8x384xf32>
    %16 = vector.extract_strided_slice %15 {offsets = [0, 0], sizes = [8, 128], strides = [1, 1]} : vector<8x384xf32> to vector<8x128xf32>
    %17 = vector.extract_strided_slice %15 {offsets = [0, 128], sizes = [8, 128], strides = [1, 1]} : vector<8x384xf32> to vector<8x128xf32>
    %18 = vector.extract_strided_slice %15 {offsets = [0, 256], sizes = [8, 128], strides = [1, 1]} : vector<8x384xf32> to vector<8x128xf32>
    %19 = vector.extract_strided_slice %9 {offsets = [0, 384], sizes = [8, 128], strides = [1, 1]} : vector<8x512xf32> to vector<8x128xf32>
    %20 = math.tanh %19 : vector<8x128xf32>
    %21 = arith.mulf %17, %5 : vector<8x128xf32>
    %22 = arith.mulf %16, %20 : vector<8x128xf32>
    %23 = arith.addf %21, %22 : vector<8x128xf32>
    %24 = math.tanh %23 : vector<8x128xf32>
    %25 = arith.mulf %18, %24 : vector<8x128xf32>
    %c1 = arith.constant 1 : index
    %c0_10 = arith.constant 0 : index
    %c0_11 = arith.constant 0 : index
    %26 = vector.load %arg2[%c1, %c0_10, %c0_11] : memref<8x8x512xf32, #tpu.memory_space<vmem>>, vector<1x8x512xf32>
    %27 = vector.shape_cast %26 : vector<1x8x512xf32> to vector<8x512xf32>
    %cst_12 = arith.constant dense<0.000000e+00> : vector<8x512xf32>
    %28 = tpu.matmul %25, %3, %cst_12 {dimension_numbers = #tpu.dot_dimension_numbers<[1], [0], [0], [1], [0, 0, 1, 1], [], []>} : vector<8x128xf32>, vector<128x512xf32>, vector<8x512xf32> -> vector<8x512xf32>
    %29 = arith.addf %27, %28 : vector<8x512xf32>
    %30 = vector.extract_strided_slice %29 {offsets = [0, 0], sizes = [8, 384], strides = [1, 1]} : vector<8x512xf32> to vector<8x384xf32>
    %31 = arith.negf %30 : vector<8x384xf32>
    %32 = math.exp %31 : vector<8x384xf32>
    %cst_13 = arith.constant 1.000000e+00 : f32
    %33 = vector.broadcast %cst_13 : f32 to vector<8x384xf32>
    %34 = arith.addf %33, %32 : vector<8x384xf32>
    %35 = arith.divf %33, %34 : vector<8x384xf32>
    %36 = vector.extract_strided_slice %35 {offsets = [0, 0], sizes = [8, 128], strides = [1, 1]} : vector<8x384xf32> to vector<8x128xf32>
    %37 = vector.extract_strided_slice %35 {offsets = [0, 128], sizes = [8, 128], strides = [1, 1]} : vector<8x384xf32> to vector<8x128xf32>
    %38 = vector.extract_strided_slice %35 {offsets = [0, 256], sizes = [8, 128], strides = [1, 1]} : vector<8x384xf32> to vector<8x128xf32>
    %39 = vector.extract_strided_slice %29 {offsets = [0, 384], sizes = [8, 128], strides = [1, 1]} : vector<8x512xf32> to vector<8x128xf32>
    %40 = math.tanh %39 : vector<8x128xf32>
    %41 = arith.mulf %37, %23 : vector<8x128xf32>
    %42 = arith.mulf %36, %40 : vector<8x128xf32>
    %43 = arith.addf %41, %42 : vector<8x128xf32>
    %44 = math.tanh %43 : vector<8x128xf32>
    %45 = arith.mulf %38, %44 : vector<8x128xf32>
    %c2 = arith.constant 2 : index
    %c0_14 = arith.constant 0 : index
    %c0_15 = arith.constant 0 : index
    %46 = vector.load %arg2[%c2, %c0_14, %c0_15] : memref<8x8x512xf32, #tpu.memory_space<vmem>>, vector<1x8x512xf32>
    %47 = vector.shape_cast %46 : vector<1x8x512xf32> to vector<8x512xf32>
    %cst_16 = arith.constant dense<0.000000e+00> : vector<8x512xf32>
    %48 = tpu.matmul %45, %3, %cst_16 {dimension_numbers = #tpu.dot_dimension_numbers<[1], [0], [0], [1], [0, 0, 1, 1], [], []>} : vector<8x128xf32>, vector<128x512xf32>, vector<8x512xf32> -> vector<8x512xf32>
    %49 = arith.addf %47, %48 : vector<8x512xf32>
    %50 = vector.extract_strided_slice %49 {offsets = [0, 0], sizes = [8, 384], strides = [1, 1]} : vector<8x512xf32> to vector<8x384xf32>
    %51 = arith.negf %50 : vector<8x384xf32>
    %52 = math.exp %51 : vector<8x384xf32>
    %cst_17 = arith.constant 1.000000e+00 : f32
    %53 = vector.broadcast %cst_17 : f32 to vector<8x384xf32>
    %54 = arith.addf %53, %52 : vector<8x384xf32>
    %55 = arith.divf %53, %54 : vector<8x384xf32>
    %56 = vector.extract_strided_slice %55 {offsets = [0, 0], sizes = [8, 128], strides = [1, 1]} : vector<8x384xf32> to vector<8x128xf32>
    %57 = vector.extract_strided_slice %55 {offsets = [0, 128], sizes = [8, 128], strides = [1, 1]} : vector<8x384xf32> to vector<8x128xf32>
    %58 = vector.extract_strided_slice %55 {offsets = [0, 256], sizes = [8, 128], strides = [1, 1]} : vector<8x384xf32> to vector<8x128xf32>
    %59 = vector.extract_strided_slice %49 {offsets = [0, 384], sizes = [8, 128], strides = [1, 1]} : vector<8x512xf32> to vector<8x128xf32>
    %60 = math.tanh %59 : vector<8x128xf32>
    %61 = arith.mulf %57, %43 : vector<8x128xf32>
    %62 = arith.mulf %56, %60 : vector<8x128xf32>
    %63 = arith.addf %61, %62 : vector<8x128xf32>
    %64 = math.tanh %63 : vector<8x128xf32>
    %65 = arith.mulf %58, %64 : vector<8x128xf32>
    %c3 = arith.constant 3 : index
    %c0_18 = arith.constant 0 : index
    %c0_19 = arith.constant 0 : index
    %66 = vector.load %arg2[%c3, %c0_18, %c0_19] : memref<8x8x512xf32, #tpu.memory_space<vmem>>, vector<1x8x512xf32>
    %67 = vector.shape_cast %66 : vector<1x8x512xf32> to vector<8x512xf32>
    %cst_20 = arith.constant dense<0.000000e+00> : vector<8x512xf32>
    %68 = tpu.matmul %65, %3, %cst_20 {dimension_numbers = #tpu.dot_dimension_numbers<[1], [0], [0], [1], [0, 0, 1, 1], [], []>} : vector<8x128xf32>, vector<128x512xf32>, vector<8x512xf32> -> vector<8x512xf32>
    %69 = arith.addf %67, %68 : vector<8x512xf32>
    %70 = vector.extract_strided_slice %69 {offsets = [0, 0], sizes = [8, 384], strides = [1, 1]} : vector<8x512xf32> to vector<8x384xf32>
    %71 = arith.negf %70 : vector<8x384xf32>
    %72 = math.exp %71 : vector<8x384xf32>
    %cst_21 = arith.constant 1.000000e+00 : f32
    %73 = vector.broadcast %cst_21 : f32 to vector<8x384xf32>
    %74 = arith.addf %73, %72 : vector<8x384xf32>
    %75 = arith.divf %73, %74 : vector<8x384xf32>
    %76 = vector.extract_strided_slice %75 {offsets = [0, 0], sizes = [8, 128], strides = [1, 1]} : vector<8x384xf32> to vector<8x128xf32>
    %77 = vector.extract_strided_slice %75 {offsets = [0, 128], sizes = [8, 128], strides = [1, 1]} : vector<8x384xf32> to vector<8x128xf32>
    %78 = vector.extract_strided_slice %75 {offsets = [0, 256], sizes = [8, 128], strides = [1, 1]} : vector<8x384xf32> to vector<8x128xf32>
    %79 = vector.extract_strided_slice %69 {offsets = [0, 384], sizes = [8, 128], strides = [1, 1]} : vector<8x512xf32> to vector<8x128xf32>
    %80 = math.tanh %79 : vector<8x128xf32>
    %81 = arith.mulf %77, %63 : vector<8x128xf32>
    %82 = arith.mulf %76, %80 : vector<8x128xf32>
    %83 = arith.addf %81, %82 : vector<8x128xf32>
    %84 = math.tanh %83 : vector<8x128xf32>
    %85 = arith.mulf %78, %84 : vector<8x128xf32>
    %c4 = arith.constant 4 : index
    %c0_22 = arith.constant 0 : index
    %c0_23 = arith.constant 0 : index
    %86 = vector.load %arg2[%c4, %c0_22, %c0_23] : memref<8x8x512xf32, #tpu.memory_space<vmem>>, vector<1x8x512xf32>
    %87 = vector.shape_cast %86 : vector<1x8x512xf32> to vector<8x512xf32>
    %cst_24 = arith.constant dense<0.000000e+00> : vector<8x512xf32>
    %88 = tpu.matmul %85, %3, %cst_24 {dimension_numbers = #tpu.dot_dimension_numbers<[1], [0], [0], [1], [0, 0, 1, 1], [], []>} : vector<8x128xf32>, vector<128x512xf32>, vector<8x512xf32> -> vector<8x512xf32>
    %89 = arith.addf %87, %88 : vector<8x512xf32>
    %90 = vector.extract_strided_slice %89 {offsets = [0, 0], sizes = [8, 384], strides = [1, 1]} : vector<8x512xf32> to vector<8x384xf32>
    %91 = arith.negf %90 : vector<8x384xf32>
    %92 = math.exp %91 : vector<8x384xf32>
    %cst_25 = arith.constant 1.000000e+00 : f32
    %93 = vector.broadcast %cst_25 : f32 to vector<8x384xf32>
    %94 = arith.addf %93, %92 : vector<8x384xf32>
    %95 = arith.divf %93, %94 : vector<8x384xf32>
    %96 = vector.extract_strided_slice %95 {offsets = [0, 0], sizes = [8, 128], strides = [1, 1]} : vector<8x384xf32> to vector<8x128xf32>
    %97 = vector.extract_strided_slice %95 {offsets = [0, 128], sizes = [8, 128], strides = [1, 1]} : vector<8x384xf32> to vector<8x128xf32>
    %98 = vector.extract_strided_slice %95 {offsets = [0, 256], sizes = [8, 128], strides = [1, 1]} : vector<8x384xf32> to vector<8x128xf32>
    %99 = vector.extract_strided_slice %89 {offsets = [0, 384], sizes = [8, 128], strides = [1, 1]} : vector<8x512xf32> to vector<8x128xf32>
    %100 = math.tanh %99 : vector<8x128xf32>
    %101 = arith.mulf %97, %83 : vector<8x128xf32>
    %102 = arith.mulf %96, %100 : vector<8x128xf32>
    %103 = arith.addf %101, %102 : vector<8x128xf32>
    %104 = math.tanh %103 : vector<8x128xf32>
    %105 = arith.mulf %98, %104 : vector<8x128xf32>
    %c5 = arith.constant 5 : index
    %c0_26 = arith.constant 0 : index
    %c0_27 = arith.constant 0 : index
    %106 = vector.load %arg2[%c5, %c0_26, %c0_27] : memref<8x8x512xf32, #tpu.memory_space<vmem>>, vector<1x8x512xf32>
    %107 = vector.shape_cast %106 : vector<1x8x512xf32> to vector<8x512xf32>
    %cst_28 = arith.constant dense<0.000000e+00> : vector<8x512xf32>
    %108 = tpu.matmul %105, %3, %cst_28 {dimension_numbers = #tpu.dot_dimension_numbers<[1], [0], [0], [1], [0, 0, 1, 1], [], []>} : vector<8x128xf32>, vector<128x512xf32>, vector<8x512xf32> -> vector<8x512xf32>
    %109 = arith.addf %107, %108 : vector<8x512xf32>
    %110 = vector.extract_strided_slice %109 {offsets = [0, 0], sizes = [8, 384], strides = [1, 1]} : vector<8x512xf32> to vector<8x384xf32>
    %111 = arith.negf %110 : vector<8x384xf32>
    %112 = math.exp %111 : vector<8x384xf32>
    %cst_29 = arith.constant 1.000000e+00 : f32
    %113 = vector.broadcast %cst_29 : f32 to vector<8x384xf32>
    %114 = arith.addf %113, %112 : vector<8x384xf32>
    %115 = arith.divf %113, %114 : vector<8x384xf32>
    %116 = vector.extract_strided_slice %115 {offsets = [0, 0], sizes = [8, 128], strides = [1, 1]} : vector<8x384xf32> to vector<8x128xf32>
    %117 = vector.extract_strided_slice %115 {offsets = [0, 128], sizes = [8, 128], strides = [1, 1]} : vector<8x384xf32> to vector<8x128xf32>
    %118 = vector.extract_strided_slice %115 {offsets = [0, 256], sizes = [8, 128], strides = [1, 1]} : vector<8x384xf32> to vector<8x128xf32>
    %119 = vector.extract_strided_slice %109 {offsets = [0, 384], sizes = [8, 128], strides = [1, 1]} : vector<8x512xf32> to vector<8x128xf32>
    %120 = math.tanh %119 : vector<8x128xf32>
    %121 = arith.mulf %117, %103 : vector<8x128xf32>
    %122 = arith.mulf %116, %120 : vector<8x128xf32>
    %123 = arith.addf %121, %122 : vector<8x128xf32>
    %124 = math.tanh %123 : vector<8x128xf32>
    %125 = arith.mulf %118, %124 : vector<8x128xf32>
    %c6 = arith.constant 6 : index
    %c0_30 = arith.constant 0 : index
    %c0_31 = arith.constant 0 : index
    %126 = vector.load %arg2[%c6, %c0_30, %c0_31] : memref<8x8x512xf32, #tpu.memory_space<vmem>>, vector<1x8x512xf32>
    %127 = vector.shape_cast %126 : vector<1x8x512xf32> to vector<8x512xf32>
    %cst_32 = arith.constant dense<0.000000e+00> : vector<8x512xf32>
    %128 = tpu.matmul %125, %3, %cst_32 {dimension_numbers = #tpu.dot_dimension_numbers<[1], [0], [0], [1], [0, 0, 1, 1], [], []>} : vector<8x128xf32>, vector<128x512xf32>, vector<8x512xf32> -> vector<8x512xf32>
    %129 = arith.addf %127, %128 : vector<8x512xf32>
    %130 = vector.extract_strided_slice %129 {offsets = [0, 0], sizes = [8, 384], strides = [1, 1]} : vector<8x512xf32> to vector<8x384xf32>
    %131 = arith.negf %130 : vector<8x384xf32>
    %132 = math.exp %131 : vector<8x384xf32>
    %cst_33 = arith.constant 1.000000e+00 : f32
    %133 = vector.broadcast %cst_33 : f32 to vector<8x384xf32>
    %134 = arith.addf %133, %132 : vector<8x384xf32>
    %135 = arith.divf %133, %134 : vector<8x384xf32>
    %136 = vector.extract_strided_slice %135 {offsets = [0, 0], sizes = [8, 128], strides = [1, 1]} : vector<8x384xf32> to vector<8x128xf32>
    %137 = vector.extract_strided_slice %135 {offsets = [0, 128], sizes = [8, 128], strides = [1, 1]} : vector<8x384xf32> to vector<8x128xf32>
    %138 = vector.extract_strided_slice %135 {offsets = [0, 256], sizes = [8, 128], strides = [1, 1]} : vector<8x384xf32> to vector<8x128xf32>
    %139 = vector.extract_strided_slice %129 {offsets = [0, 384], sizes = [8, 128], strides = [1, 1]} : vector<8x512xf32> to vector<8x128xf32>
    %140 = math.tanh %139 : vector<8x128xf32>
    %141 = arith.mulf %137, %123 : vector<8x128xf32>
    %142 = arith.mulf %136, %140 : vector<8x128xf32>
    %143 = arith.addf %141, %142 : vector<8x128xf32>
    %144 = math.tanh %143 : vector<8x128xf32>
    %145 = arith.mulf %138, %144 : vector<8x128xf32>
    %c7 = arith.constant 7 : index
    %c0_34 = arith.constant 0 : index
    %c0_35 = arith.constant 0 : index
    %146 = vector.load %arg2[%c7, %c0_34, %c0_35] : memref<8x8x512xf32, #tpu.memory_space<vmem>>, vector<1x8x512xf32>
    %147 = vector.shape_cast %146 : vector<1x8x512xf32> to vector<8x512xf32>
    %cst_36 = arith.constant dense<0.000000e+00> : vector<8x512xf32>
    %148 = tpu.matmul %145, %3, %cst_36 {dimension_numbers = #tpu.dot_dimension_numbers<[1], [0], [0], [1], [0, 0, 1, 1], [], []>} : vector<8x128xf32>, vector<128x512xf32>, vector<8x512xf32> -> vector<8x512xf32>
    %149 = arith.addf %147, %148 : vector<8x512xf32>
    %150 = vector.extract_strided_slice %149 {offsets = [0, 0], sizes = [8, 384], strides = [1, 1]} : vector<8x512xf32> to vector<8x384xf32>
    %151 = arith.negf %150 : vector<8x384xf32>
    %152 = math.exp %151 : vector<8x384xf32>
    %cst_37 = arith.constant 1.000000e+00 : f32
    %153 = vector.broadcast %cst_37 : f32 to vector<8x384xf32>
    %154 = arith.addf %153, %152 : vector<8x384xf32>
    %155 = arith.divf %153, %154 : vector<8x384xf32>
    %156 = vector.extract_strided_slice %155 {offsets = [0, 0], sizes = [8, 128], strides = [1, 1]} : vector<8x384xf32> to vector<8x128xf32>
    %157 = vector.extract_strided_slice %155 {offsets = [0, 128], sizes = [8, 128], strides = [1, 1]} : vector<8x384xf32> to vector<8x128xf32>
    %158 = vector.extract_strided_slice %155 {offsets = [0, 256], sizes = [8, 128], strides = [1, 1]} : vector<8x384xf32> to vector<8x128xf32>
    %159 = vector.extract_strided_slice %149 {offsets = [0, 384], sizes = [8, 128], strides = [1, 1]} : vector<8x512xf32> to vector<8x128xf32>
    %160 = math.tanh %159 : vector<8x128xf32>
    %161 = arith.mulf %157, %143 : vector<8x128xf32>
    %162 = arith.mulf %156, %160 : vector<8x128xf32>
    %163 = arith.addf %161, %162 : vector<8x128xf32>
    %164 = math.tanh %163 : vector<8x128xf32>
    %165 = arith.mulf %158, %164 : vector<8x128xf32>
    %c0_38 = arith.constant 0 : index
    %c0_39 = arith.constant 0 : index
    %166 = vector.load %arg4[%c0_38, %c0_39] : memref<8x128xf32, #tpu.memory_space<vmem>>, vector<8x128xf32>
    tpu.vector_store %arg4[%c0_38, %c0_39], %165 {strides = array<i32>} : memref<8x128xf32, #tpu.memory_space<vmem>>, vector<8x128xf32>,
    %c0_40 = arith.constant 0 : index
    %c0_41 = arith.constant 0 : index
    %167 = vector.load %arg6[%c0_40, %c0_41] : memref<8x128xf32, #tpu.memory_space<vmem>>, vector<8x128xf32>
    tpu.vector_store %arg6[%c0_40, %c0_41], %163 {strides = array<i32>} : memref<8x128xf32, #tpu.memory_space<vmem>>, vector<8x128xf32>,
    return
  }
  func.func @transform_0(%arg0: i32, %arg1: i32) -> (i32, i32, i32) {
    %c0_i32 = arith.constant 0 : i32
    %c0_i32_0 = arith.constant 0 : i32
    return %arg1, %arg0, %c0_i32 : i32, i32, i32
  }
  func.func @transform_2(%arg0: i32, %arg1: i32) -> (i32, i32) {
    %c0_i32 = arith.constant 0 : i32
    %c0_i32_0 = arith.constant 0 : i32
    return %arg0, %c0_i32 : i32, i32
  }
}

</mosaic_0001>

<llo_original>
// kernel: tpu_custom_call.1
$region0: #{tpu_custom_call.1}
  #allocation0 [shape = 'u32[]', space=smem, size = 0x4, offset = 0x4, fixed_abs, tag = 'smem constant byte address 0x4 - core index']
  #allocation1 [shape = 'u32[144,128]{1,0:T(1,128)}', space=vmem, size = 0x12000, scoped, tag = 'internal scratch']
  #allocation2 [shape = 'f32[128,512]{1,0:T(8,128)}', space=vmem, size = 0x40000, scoped, tag = 'scratch operand']
  #allocation3 [shape = 'f32[8,128]{1,0:T(8,128)}', space=vmem, size = 0x1000, scoped, tag = 'scratch operand']
  #allocation4 [shape = 's32[1]{0}', space=sflag, size = 0x4, scoped, tag = 'scratch operand']
  #allocation9 [shape = 's32[]', space=sflag, size = 0x4, offset = 0, fixed_abs, tag = 'sflag constant byte address 0x0 - dummy sync flag']
  #allocation10 [shape = 's32[]', space=sflag, size = 0x4, offset = 0, fixed_abs, tag = 'sflag constant byte address 0x0 - dummy sync flag']
  #allocation11 [shape = 'u32[]', space=smem, size = 0x4, offset = 0x44, fixed_abs, tag = 'smem constant byte address 0x44 - assertion arg 0']
  #allocation12 [shape = 'u32[]', space=smem, size = 0x4, offset = 0x48, fixed_abs, tag = 'smem constant byte address 0x48 - assertion arg 1']
  %s0 = inlined_call_operand.hbm [shape: f32[8,8,512], index: 0, kind: input, shape index: {}]
  %s1 = inlined_call_operand.hbm [shape: f32[128,512], index: 1, kind: input, shape index: {}]
  %s2 = inlined_call_operand.hbm [shape: f32[8,128], index: 2, kind: output, shape index: {}]
  %s3 = sld [smem:[#allocation0]]
  $region26: #{tpu_custom_call.1} parent=0
    _
  %s5 = ssub.s32 1, %s3
  %s6 = scalar_select 0, %s5, %s3
  $region1: #{tpu_custom_call.1} parent=0
    #allocation5 [shape = 'u8[131072]{0}', space=vmem, size = 0x20000, scoped, tag = 'input window, operand 0, single buffered']
    #allocation6 [shape = 's32[1]{0}', space=sflag, size = 0x4, scoped, tag = 'scoped memory for tpu_custom_call.1']
    #allocation7 [shape = 's32[1]{0}', space=sflag, size = 0x4, scoped, tag = 'scoped memory for tpu_custom_call.1']
    #allocation8 [shape = 'u8[4096]{0}', space=vmem, size = 0x1000, scoped, tag = 'output window, operand 0, single buffered']
    %7 = vsyncpa [#allocation6], 0
    %8 = vsyncpa [#allocation7], 0
    // Predicated region
    $region2: #{tpu_custom_call.1} parent=1 // pred_check
      _
    $region3: #{tpu_custom_call.1} parent=1 // pred_check_branch
      %10 = sbr.rel (0) target = $region5
    $region4: #{tpu_custom_call.1} parent=1 // pred_region
      %s12 = ssub.s32 4096, 4096
      %13 = vsyncadd [#allocation6], %s12
      %s14 = sshll.u32 [#allocation5], 4
      %s15 = int_to_ptr.vmem [resolvable:$true] %s14
      %20 = dma.hbm_to_vmem [thread:$0]  %s0, 4096, %s15, [#allocation6], 512, 512, 32
    $region5: #{tpu_custom_call.1} parent=1 // pred_fallthru
      _
    // Predicated region
    $region6: #{tpu_custom_call.1} parent=1 // pred_check
      _
    $region7: #{tpu_custom_call.1} parent=1 // pred_check_branch
      %22 = sbr.rel (0) target = $region9
    $region8: #{tpu_custom_call.1} parent=1 // pred_region
      %23 = dma.done [#allocation6], 4096
    $region9: #{tpu_custom_call.1} parent=1 // pred_fallthru
      _
    %p24 = scmp.eq.s32.totalorder 0, 0
    // Predicated region
    $region10: #{tpu_custom_call.1} parent=1 // pred_check
      %p25 = pneg %p24
    $region11: #{tpu_custom_call.1} parent=1 // pred_check_branch
      %27 = sbr.rel (%p25) target = $region13
    $region12: #{tpu_custom_call.1} parent=1 // pred_region
      // Predicated region
      $region14: #{tpu_custom_call.1} parent=12 // pred_check
        _
      $region15: #{tpu_custom_call.1} parent=12 // pred_check_branch
        %29 = sbr.rel target = $region17
      $region16: #{tpu_custom_call.1} parent=12 // pred_region
        %30 = sst [smem:[#allocation11]] [#allocation10]
        %31 = sst [smem:[#allocation12]] [#allocation9]
      $region17: #{tpu_custom_call.1} parent=12 // pred_fallthru
        _
      %33 = shalt.err (0)
      %s35 = sshll.u32 [#allocation2], 4
      %s36 = int_to_ptr.vmem [resolvable:$true] %s35
      %38 = dma.hbm_to_vmem [thread:$0]  %s1, 8192, %s36, [#allocation4]
      %s39 = smul.u32 8, 16
      %s40 = smul.u32 %s39, 4
      %s41 = sshll.u32 %s40, 4
      %42 = dma.done [#allocation4], %s41
      %43 = vst [vmem:[#allocation8] sm:$0xff] 0.0
      %44 = vst [vmem:[#allocation3] sm:$0xff] 0.0
    $region13: #{tpu_custom_call.1} parent=1 // pred_fallthru
      _
    %v45 = vld [vmem:[#allocation2] sm:$0xff]
    %v46 = vld [vmem:[#allocation2 + $0x8] sm:$0xff]
    %v47 = vld [vmem:[#allocation2 + $0x10] sm:$0xff]
    %v48 = vld [vmem:[#allocation2 + $0x18] sm:$0xff]
    %v49 = vld [vmem:[#allocation2 + $0x20] sm:$0xff]
    %v50 = vld [vmem:[#allocation2 + $0x28] sm:$0xff]
    %v51 = vld [vmem:[#allocation2 + $0x30] sm:$0xff]
    %v52 = vld [vmem:[#allocation2 + $0x38] sm:$0xff]
    %v53 = vld [vmem:[#allocation2 + $0x40] sm:$0xff]
    %v54 = vld [vmem:[#allocation2 + $0x48] sm:$0xff]
    %v55 = vld [vmem:[#allocation2 + $0x50] sm:$0xff]
    %v56 = vld [vmem:[#allocation2 + $0x58] sm:$0xff]
    %v57 = vld [vmem:[#allocation2 + $0x60] sm:$0xff]
    %v58 = vld [vmem:[#allocation2 + $0x68] sm:$0xff]
    %v59 = vld [vmem:[#allocation2 + $0x70] sm:$0xff]
    %v60 = vld [vmem:[#allocation2 + $0x78] sm:$0xff]
    %v61 = vld [vmem:[#allocation2 + $0x80] sm:$0xff]
    %v62 = vld [vmem:[#allocation2 + $0x88] sm:$0xff]
    %v63 = vld [vmem:[#allocation2 + $0x90] sm:$0xff]
    %v64 = vld [vmem:[#allocation2 + $0x98] sm:$0xff]
    %v65 = vld [vmem:[#allocation2 + $0xa0] sm:$0xff]
    %v66 = vld [vmem:[#allocation2 + $0xa8] sm:$0xff]
    %v67 = vld [vmem:[#allocation2 + $0xb0] sm:$0xff]
    %v68 = vld [vmem:[#allocation2 + $0xb8] sm:$0xff]
    %v69 = vld [vmem:[#allocation2 + $0xc0] sm:$0xff]
    %v70 = vld [vmem:[#allocation2 + $0xc8] sm:$0xff]
    %v71 = vld [vmem:[#allocation2 + $0xd0] sm:$0xff]
    %v72 = vld [vmem:[#allocation2 + $0xd8] sm:$0xff]
    %v73 = vld [vmem:[#allocation2 + $0xe0] sm:$0xff]
    %v74 = vld [vmem:[#allocation2 + $0xe8] sm:$0xff]
    %v75 = vld [vmem:[#allocation2 + $0xf0] sm:$0xff]
    %v76 = vld [vmem:[#allocation2 + $0xf8] sm:$0xff]
    %v77 = vld [vmem:[#allocation2 + $0x100] sm:$0xff]
    %v78 = vld [vmem:[#allocation2 + $0x108] sm:$0xff]
    %v79 = vld [vmem:[#allocation2 + $0x110] sm:$0xff]
    %v80 = vld [vmem:[#allocation2 + $0x118] sm:$0xff]
    %v81 = vld [vmem:[#allocation2 + $0x120] sm:$0xff]
    %v82 = vld [vmem:[#allocation2 + $0x128] sm:$0xff]
    %v83 = vld [vmem:[#allocation2 + $0x130] sm:$0xff]
    %v84 = vld [vmem:[#allocation2 + $0x138] sm:$0xff]
    %v85 = vld [vmem:[#allocation2 + $0x140] sm:$0xff]
    %v86 = vld [vmem:[#allocation2 + $0x148] sm:$0xff]
    %v87 = vld [vmem:[#allocation2 + $0x150] sm:$0xff]
    %v88 = vld [vmem:[#allocation2 + $0x158] sm:$0xff]
    %v89 = vld [vmem:[#allocation2 + $0x160] sm:$0xff]
    %v90 = vld [vmem:[#allocation2 + $0x168] sm:$0xff]
    %v91 = vld [vmem:[#allocation2 + $0x170] sm:$0xff]
    %v92 = vld [vmem:[#allocation2 + $0x178] sm:$0xff]
    %v93 = vld [vmem:[#allocation2 + $0x180] sm:$0xff]
    %v94 = vld [vmem:[#allocation2 + $0x188] sm:$0xff]
    %v95 = vld [vmem:[#allocation2 + $0x190] sm:$0xff]
    %v96 = vld [vmem:[#allocation2 + $0x198] sm:$0xff]
    %v97 = vld [vmem:[#allocation2 + $0x1a0] sm:$0xff]
    %v98 = vld [vmem:[#allocation2 + $0x1a8] sm:$0xff]
    %v99 = vld [vmem:[#allocation2 + $0x1b0] sm:$0xff]
    %v100 = vld [vmem:[#allocation2 + $0x1b8] sm:$0xff]
    %v101 = vld [vmem:[#allocation2 + $0x1c0] sm:$0xff]
    %v102 = vld [vmem:[#allocation2 + $0x1c8] sm:$0xff]
    %v103 = vld [vmem:[#allocation2 + $0x1d0] sm:$0xff]
    %v104 = vld [vmem:[#allocation2 + $0x1d8] sm:$0xff]
    %v105 = vld [vmem:[#allocation2 + $0x1e0] sm:$0xff]
    %v106 = vld [vmem:[#allocation2 + $0x1e8] sm:$0xff]
    %v107 = vld [vmem:[#allocation2 + $0x1f0] sm:$0xff]
    %v108 = vld [vmem:[#allocation2 + $0x1f8] sm:$0xff]
    %v109 = vld [vmem:[#allocation8] sm:$0xff]
    %v110 = vld [vmem:[#allocation3] sm:$0xff]
    %v111 = vld [vmem:[#allocation5] sm:$0xff]
    %v112 = vld [vmem:[#allocation5 + $0x8] sm:$0xff]
    %v113 = vld [vmem:[#allocation5 + $0x10] sm:$0xff]
    %v114 = vld [vmem:[#allocation5 + $0x18] sm:$0xff]
    %115 = vmatprep.subr.mxu0 %v106
    %116 = vmatpush1.msra.mxu0 %v105
    %117 = vmatprep.subr.mxu0 %v102
    %118 = vmatpush1.msra.mxu0 %v101
    %119 = vmatprep.subr.mxu0 %v98
    %120 = vmatpush1.msra.mxu0 %v97
    %121 = vmatprep.subr.mxu0 %v94
    %122 = vmatpush1.msra.mxu0 %v93
    %123 = vmatprep.subr.mxu0 %v90
    %124 = vmatpush1.msra.mxu0 %v89
    %125 = vmatprep.subr.mxu0 %v86
    %126 = vmatpush1.msra.mxu0 %v85
    %127 = vmatprep.subr.mxu0 %v82
    %128 = vmatpush1.msra.mxu0 %v81
    %129 = vmatprep.subr.mxu0 %v78
    %130 = vmatpush1.msra.mxu0 %v77
    %131 = vmatprep.subr.mxu0 %v74
    %132 = vmatpush1.msra.mxu0 %v73
    %133 = vmatprep.subr.mxu0 %v70
    %134 = vmatpush1.msra.mxu0 %v69
    %135 = vmatprep.subr.mxu0 %v66
    %136 = vmatpush1.msra.mxu0 %v65
    %137 = vmatprep.subr.mxu0 %v62
    %138 = vmatpush1.msra.mxu0 %v61
    %139 = vmatprep.subr.mxu0 %v58
    %140 = vmatpush1.msra.mxu0 %v57
    %141 = vmatprep.subr.mxu0 %v54
    %142 = vmatpush1.msra.mxu0 %v53
    %143 = vmatprep.subr.mxu0 %v50
    %144 = vmatpush1.msra.mxu0 %v49
    %145 = vmatprep.subr.mxu0 %v46
    %146 = vmatpush1.msra.mxu0 %v45
    %147 = vmatprep.subr.mxu0 0.0
    %148 = vmatpush2.msra.mxu0 0.0
    %149 = vmatprep.subr.mxu0 0.0
    %150 = vmatpush2.msra.mxu0 0.0
    %151 = vmatprep.subr.mxu0 0.0
    %152 = vmatpush2.msra.mxu0 0.0
    %153 = vmatprep.subr.mxu0 0.0
    %154 = vmatpush2.msra.mxu0 0.0
    %155 = vmatprep.subr.mxu0 0.0
    %156 = vmatpush2.msra.mxu0 0.0
    %157 = vmatprep.subr.mxu0 0.0
    %158 = vmatpush2.msra.mxu0 0.0
    %159 = vmatprep.subr.mxu0 0.0
    %160 = vmatpush2.msra.mxu0 0.0
    %161 = vmatprep.subr.mxu0 0.0
    %162 = vmatpush2.msra.mxu0 0.0
    %163 = vmatprep.subr.mxu0 0.0
    %164 = vmatpush2.msra.mxu0 0.0
    %165 = vmatprep.subr.mxu0 0.0
    %166 = vmatpush2.msra.mxu0 0.0
    %167 = vmatprep.subr.mxu0 0.0
    %168 = vmatpush2.msra.mxu0 0.0
    %169 = vmatprep.subr.mxu0 0.0
    %170 = vmatpush2.msra.mxu0 0.0
    %171 = vmatprep.subr.mxu0 0.0
    %172 = vmatpush2.msra.mxu0 0.0
    %173 = vmatprep.subr.mxu0 0.0
    %174 = vmatpush2.msra.mxu0 0.0
    %175 = vmatprep.subr.mxu0 0.0
    %176 = vmatpush2.msra.mxu0 0.0
    %177 = vmatprep.subr.mxu0 0.0
    %178 = vmatpush2.msra.mxu0 0.0
    %179 = vmatprep.mubr.f32.mxu0 0.0
    %180 = vmatmul.mubr.f32.gmra.mxu0 %v109
    %v181 = vpop.f32.mrf.mxu0
    %v182 = vadd.f32 0.0, %v181
    %v183 = vpop.f32.mrf.mxu0
    %v184 = vadd.f32 0.0, %v183
    %185 = vdwg.mxu0
    %186 = vmatprep.subr.mxu0 %v108
    %187 = vmatpush1.msra.mxu0 %v107
    %188 = vmatprep.subr.mxu0 %v104
    %189 = vmatpush1.msra.mxu0 %v103
    %190 = vmatprep.subr.mxu0 %v100
    %191 = vmatpush1.msra.mxu0 %v99
    %192 = vmatprep.subr.mxu0 %v96
    %193 = vmatpush1.msra.mxu0 %v95
    %194 = vmatprep.subr.mxu0 %v92
    %195 = vmatpush1.msra.mxu0 %v91
    %196 = vmatprep.subr.mxu0 %v88
    %197 = vmatpush1.msra.mxu0 %v87
    %198 = vmatprep.subr.mxu0 %v84
    %199 = vmatpush1.msra.mxu0 %v83
    %200 = vmatprep.subr.mxu0 %v80
    %201 = vmatpush1.msra.mxu0 %v79
    %202 = vmatprep.subr.mxu0 %v76
    %203 = vmatpush1.msra.mxu0 %v75
    %204 = vmatprep.subr.mxu0 %v72
    %205 = vmatpush1.msra.mxu0 %v71
    %206 = vmatprep.subr.mxu0 %v68
    %207 = vmatpush1.msra.mxu0 %v67
    %208 = vmatprep.subr.mxu0 %v64
    %209 = vmatpush1.msra.mxu0 %v63
    %210 = vmatprep.subr.mxu0 %v60
    %211 = vmatpush1.msra.mxu0 %v59
    %212 = vmatprep.subr.mxu0 %v56
    %213 = vmatpush1.msra.mxu0 %v55
    %214 = vmatprep.subr.mxu0 %v52
    %215 = vmatpush1.msra.mxu0 %v51
    %216 = vmatprep.subr.mxu0 %v48
    %217 = vmatpush1.msra.mxu0 %v47
    %218 = vmatprep.subr.mxu0 0.0
    %219 = vmatpush2.msra.mxu0 0.0
    %220 = vmatprep.subr.mxu0 0.0
    %221 = vmatpush2.msra.mxu0 0.0
    %222 = vmatprep.subr.mxu0 0.0
    %223 = vmatpush2.msra.mxu0 0.0
    %224 = vmatprep.subr.mxu0 0.0
    %225 = vmatpush2.msra.mxu0 0.0
    %226 = vmatprep.subr.mxu0 0.0
    %227 = vmatpush2.msra.mxu0 0.0
    %228 = vmatprep.subr.mxu0 0.0
    %229 = vmatpush2.msra.mxu0 0.0
    %230 = vmatprep.subr.mxu0 0.0
    %231 = vmatpush2.msra.mxu0 0.0
    %232 = vmatprep.subr.mxu0 0.0
    %233 = vmatpush2.msra.mxu0 0.0
    %234 = vmatprep.subr.mxu0 0.0
    %235 = vmatpush2.msra.mxu0 0.0
    %236 = vmatprep.subr.mxu0 0.0
    %237 = vmatpush2.msra.mxu0 0.0
    %238 = vmatprep.subr.mxu0 0.0
    %239 = vmatpush2.msra.mxu0 0.0
    %240 = vmatprep.subr.mxu0 0.0
    %241 = vmatpush2.msra.mxu0 0.0
    %242 = vmatprep.subr.mxu0 0.0
    %243 = vmatpush2.msra.mxu0 0.0
    %244 = vmatprep.subr.mxu0 0.0
    %245 = vmatpush2.msra.mxu0 0.0
    %246 = vmatprep.subr.mxu0 0.0
    %247 = vmatpush2.msra.mxu0 0.0
    %248 = vmatprep.subr.mxu0 0.0
    %249 = vmatpush2.msra.mxu0 0.0
    %250 = vmatprep.mubr.f32.mxu0 0.0
    %251 = vmatmul.mubr.f32.gmra.mxu0 %v109
    %v252 = vpop.f32.mrf.mxu0
    %v253 = vadd.f32 0.0, %v252
    %v254 = vpop.f32.mrf.mxu0
    %v255 = vadd.f32 0.0, %v254
    %256 = vdwg.mxu0
    %v257 = vadd.f32 %v111, %v182
    %v258 = vadd.f32 %v112, %v184
    %v259 = vadd.f32 %v113, %v253
    %v260 = vadd.f32 %v114, %v255
    %v261 = vxor.u32 %v257, 2147483648
    %v262 = vxor.u32 %v258, 2147483648
    %v263 = vxor.u32 %v259, 2147483648
    %v264 = vmul.f32 %v261, 1.442695
    %v265 = vpow.pop %v264
    %v266 = vmul.f32 %v262, 1.442695
    %v267 = vpow.pop %v266
    %v268 = vmul.f32 %v263, 1.442695
    %v269 = vpow.pop %v268
    %v270 = vadd.f32 %v265, 1.0
    %v271 = vadd.f32 %v267, 1.0
    %v272 = vadd.f32 %v269, 1.0
    %v273 = vrcp.pop %v270
    %v274 = vmul.f32 1.0, %v273
    %v275 = vrcp.pop %v271
    %v276 = vmul.f32 1.0, %v275
    %v277 = vrcp.pop %v272
    %v278 = vmul.f32 1.0, %v277
    %v279 = vtanh.pop %v260
    %v280 = vmul.f32 %v276, %v110
    %v281 = vmul.f32 %v274, %v279
    %v282 = vadd.f32 %v280, %v281
    %v283 = vtanh.pop %v282
    %v284 = vmul.f32 %v278, %v283
    %s285 = scalar_lea.vmem [#allocation5], 32
    %v286 = vld [vmem:[%s285] sm:$0xff]
    %v287 = vld [vmem:[%s285 + $0x8] sm:$0xff]
    %v288 = vld [vmem:[%s285 + $0x10] sm:$0xff]
    %v289 = vld [vmem:[%s285 + $0x18] sm:$0xff]
    %290 = vmatprep.subr.mxu0 %v106
    %291 = vmatpush1.msra.mxu0 %v105
    %292 = vmatprep.subr.mxu0 %v102
    %293 = vmatpush1.msra.mxu0 %v101
    %294 = vmatprep.subr.mxu0 %v98
    %295 = vmatpush1.msra.mxu0 %v97
    %296 = vmatprep.subr.mxu0 %v94
    %297 = vmatpush1.msra.mxu0 %v93
    %298 = vmatprep.subr.mxu0 %v90
    %299 = vmatpush1.msra.mxu0 %v89
    %300 = vmatprep.subr.mxu0 %v86
    %301 = vmatpush1.msra.mxu0 %v85
    %302 = vmatprep.subr.mxu0 %v82
    %303 = vmatpush1.msra.mxu0 %v81
    %304 = vmatprep.subr.mxu0 %v78
    %305 = vmatpush1.msra.mxu0 %v77
    %306 = vmatprep.subr.mxu0 %v74
    %307 = vmatpush1.msra.mxu0 %v73
    %308 = vmatprep.subr.mxu0 %v70
    %309 = vmatpush1.msra.mxu0 %v69
    %310 = vmatprep.subr.mxu0 %v66
    %311 = vmatpush1.msra.mxu0 %v65
    %312 = vmatprep.subr.mxu0 %v62
    %313 = vmatpush1.msra.mxu0 %v61
    %314 = vmatprep.subr.mxu0 %v58
    %315 = vmatpush1.msra.mxu0 %v57
    %316 = vmatprep.subr.mxu0 %v54
    %317 = vmatpush1.msra.mxu0 %v53
    %318 = vmatprep.subr.mxu0 %v50
    %319 = vmatpush1.msra.mxu0 %v49
    %320 = vmatprep.subr.mxu0 %v46
    %321 = vmatpush1.msra.mxu0 %v45
    %322 = vmatprep.subr.mxu0 0.0
    %323 = vmatpush2.msra.mxu0 0.0
    %324 = vmatprep.subr.mxu0 0.0
    %325 = vmatpush2.msra.mxu0 0.0
    %326 = vmatprep.subr.mxu0 0.0
    %327 = vmatpush2.msra.mxu0 0.0
    %328 = vmatprep.subr.mxu0 0.0
    %329 = vmatpush2.msra.mxu0 0.0
    %330 = vmatprep.subr.mxu0 0.0
    %331 = vmatpush2.msra.mxu0 0.0
    %332 = vmatprep.subr.mxu0 0.0
    %333 = vmatpush2.msra.mxu0 0.0
    %334 = vmatprep.subr.mxu0 0.0
    %335 = vmatpush2.msra.mxu0 0.0
    %336 = vmatprep.subr.mxu0 0.0
    %337 = vmatpush2.msra.mxu0 0.0
    %338 = vmatprep.subr.mxu0 0.0
    %339 = vmatpush2.msra.mxu0 0.0
    %340 = vmatprep.subr.mxu0 0.0
    %341 = vmatpush2.msra.mxu0 0.0
    %342 = vmatprep.subr.mxu0 0.0
    %343 = vmatpush2.msra.mxu0 0.0
    %344 = vmatprep.subr.mxu0 0.0
    %345 = vmatpush2.msra.mxu0 0.0
    %346 = vmatprep.subr.mxu0 0.0
    %347 = vmatpush2.msra.mxu0 0.0
    %348 = vmatprep.subr.mxu0 0.0
    %349 = vmatpush2.msra.mxu0 0.0
    %350 = vmatprep.subr.mxu0 0.0
    %351 = vmatpush2.msra.mxu0 0.0
    %352 = vmatprep.subr.mxu0 0.0
    %353 = vmatpush2.msra.mxu0 0.0
    %354 = vmatprep.mubr.f32.mxu0 0.0
    %355 = vmatmul.mubr.f32.gmra.mxu0 %v284
    %v356 = vpop.f32.mrf.mxu0
    %v357 = vadd.f32 0.0, %v356
    %v358 = vpop.f32.mrf.mxu0
    %v359 = vadd.f32 0.0, %v358
    %360 = vdwg.mxu0
    %361 = vmatprep.subr.mxu0 %v108
    %362 = vmatpush1.msra.mxu0 %v107
    %363 = vmatprep.subr.mxu0 %v104
    %364 = vmatpush1.msra.mxu0 %v103
    %365 = vmatprep.subr.mxu0 %v100
    %366 = vmatpush1.msra.mxu0 %v99
    %367 = vmatprep.subr.mxu0 %v96
    %368 = vmatpush1.msra.mxu0 %v95
    %369 = vmatprep.subr.mxu0 %v92
    %370 = vmatpush1.msra.mxu0 %v91
    %371 = vmatprep.subr.mxu0 %v88
    %372 = vmatpush1.msra.mxu0 %v87
    %373 = vmatprep.subr.mxu0 %v84
    %374 = vmatpush1.msra.mxu0 %v83
    %375 = vmatprep.subr.mxu0 %v80
    %376 = vmatpush1.msra.mxu0 %v79
    %377 = vmatprep.subr.mxu0 %v76
    %378 = vmatpush1.msra.mxu0 %v75
    %379 = vmatprep.subr.mxu0 %v72
    %380 = vmatpush1.msra.mxu0 %v71
    %381 = vmatprep.subr.mxu0 %v68
    %382 = vmatpush1.msra.mxu0 %v67
    %383 = vmatprep.subr.mxu0 %v64
    %384 = vmatpush1.msra.mxu0 %v63
    %385 = vmatprep.subr.mxu0 %v60
    %386 = vmatpush1.msra.mxu0 %v59
    %387 = vmatprep.subr.mxu0 %v56
    %388 = vmatpush1.msra.mxu0 %v55
    %389 = vmatprep.subr.mxu0 %v52
    %390 = vmatpush1.msra.mxu0 %v51
    %391 = vmatprep.subr.mxu0 %v48
    %392 = vmatpush1.msra.mxu0 %v47
    %393 = vmatprep.subr.mxu0 0.0
    %394 = vmatpush2.msra.mxu0 0.0
    %395 = vmatprep.subr.mxu0 0.0
    %396 = vmatpush2.msra.mxu0 0.0
    %397 = vmatprep.subr.mxu0 0.0
    %398 = vmatpush2.msra.mxu0 0.0
    %399 = vmatprep.subr.mxu0 0.0
    %400 = vmatpush2.msra.mxu0 0.0
    %401 = vmatprep.subr.mxu0 0.0
    %402 = vmatpush2.msra.mxu0 0.0
    %403 = vmatprep.subr.mxu0 0.0
    %404 = vmatpush2.msra.mxu0 0.0
    %405 = vmatprep.subr.mxu0 0.0
    %406 = vmatpush2.msra.mxu0 0.0
    %407 = vmatprep.subr.mxu0 0.0
    %408 = vmatpush2.msra.mxu0 0.0
    %409 = vmatprep.subr.mxu0 0.0
    %410 = vmatpush2.msra.mxu0 0.0
    %411 = vmatprep.subr.mxu0 0.0
    %412 = vmatpush2.msra.mxu0 0.0
    %413 = vmatprep.subr.mxu0 0.0
    %414 = vmatpush2.msra.mxu0 0.0
    %415 = vmatprep.subr.mxu0 0.0
    %416 = vmatpush2.msra.mxu0 0.0
    %417 = vmatprep.subr.mxu0 0.0
    %418 = vmatpush2.msra.mxu0 0.0
    %419 = vmatprep.subr.mxu0 0.0
    %420 = vmatpush2.msra.mxu0 0.0
    %421 = vmatprep.subr.mxu0 0.0
    %422 = vmatpush2.msra.mxu0 0.0
    %423 = vmatprep.subr.mxu0 0.0
    %424 = vmatpush2.msra.mxu0 0.0
    %425 = vmatprep.mubr.f32.mxu0 0.0
    %426 = vmatmul.mubr.f32.gmra.mxu0 %v284
    %v427 = vpop.f32.mrf.mxu0
    %v428 = vadd.f32 0.0, %v427
    %v429 = vpop.f32.mrf.mxu0
    %v430 = vadd.f32 0.0, %v429
    %431 = vdwg.mxu0
    %v432 = vadd.f32 %v286, %v357
    %v433 = vadd.f32 %v287, %v359
    %v434 = vadd.f32 %v288, %v428
    %v435 = vadd.f32 %v289, %v430
    %v436 = vxor.u32 %v432, 2147483648
    %v437 = vxor.u32 %v433, 2147483648
    %v438 = vxor.u32 %v434, 2147483648
    %v439 = vmul.f32 %v436, 1.442695
    %v440 = vpow.pop %v439
    %v441 = vmul.f32 %v437, 1.442695
    %v442 = vpow.pop %v441
    %v443 = vmul.f32 %v438, 1.442695
    %v444 = vpow.pop %v443
    %v445 = vadd.f32 %v440, 1.0
    %v446 = vadd.f32 %v442, 1.0
    %v447 = vadd.f32 %v444, 1.0
    %v448 = vrcp.pop %v445
    %v449 = vmul.f32 1.0, %v448
    %v450 = vrcp.pop %v446
    %v451 = vmul.f32 1.0, %v450
    %v452 = vrcp.pop %v447
    %v453 = vmul.f32 1.0, %v452
    %v454 = vtanh.pop %v435
    %v455 = vmul.f32 %v451, %v282
    %v456 = vmul.f32 %v449, %v454
    %v457 = vadd.f32 %v455, %v456
    %v458 = vtanh.pop %v457
    %v459 = vmul.f32 %v453, %v458
    %s460 = scalar_lea.vmem [#allocation5], 64
    %v461 = vld [vmem:[%s460] sm:$0xff]
    %v462 = vld [vmem:[%s460 + $0x8] sm:$0xff]
    %v463 = vld [vmem:[%s460 + $0x10] sm:$0xff]
    %v464 = vld [vmem:[%s460 + $0x18] sm:$0xff]
    %465 = vmatprep.subr.mxu0 %v106
    %466 = vmatpush1.msra.mxu0 %v105
    %467 = vmatprep.subr.mxu0 %v102
    %468 = vmatpush1.msra.mxu0 %v101
    %469 = vmatprep.subr.mxu0 %v98
    %470 = vmatpush1.msra.mxu0 %v97
    %471 = vmatprep.subr.mxu0 %v94
    %472 = vmatpush1.msra.mxu0 %v93
    %473 = vmatprep.subr.mxu0 %v90
    %474 = vmatpush1.msra.mxu0 %v89
    %475 = vmatprep.subr.mxu0 %v86
    %476 = vmatpush1.msra.mxu0 %v85
    %477 = vmatprep.subr.mxu0 %v82
    %478 = vmatpush1.msra.mxu0 %v81
    %479 = vmatprep.subr.mxu0 %v78
    %480 = vmatpush1.msra.mxu0 %v77
    %481 = vmatprep.subr.mxu0 %v74
    %482 = vmatpush1.msra.mxu0 %v73
    %483 = vmatprep.subr.mxu0 %v70
    %484 = vmatpush1.msra.mxu0 %v69
    %485 = vmatprep.subr.mxu0 %v66
    %486 = vmatpush1.msra.mxu0 %v65
    %487 = vmatprep.subr.mxu0 %v62
    %488 = vmatpush1.msra.mxu0 %v61
    %489 = vmatprep.subr.mxu0 %v58
    %490 = vmatpush1.msra.mxu0 %v57
    %491 = vmatprep.subr.mxu0 %v54
    %492 = vmatpush1.msra.mxu0 %v53
    %493 = vmatprep.subr.mxu0 %v50
    %494 = vmatpush1.msra.mxu0 %v49
    %495 = vmatprep.subr.mxu0 %v46
    %496 = vmatpush1.msra.mxu0 %v45
    %497 = vmatprep.subr.mxu0 0.0
    %498 = vmatpush2.msra.mxu0 0.0
    %499 = vmatprep.subr.mxu0 0.0
    %500 = vmatpush2.msra.mxu0 0.0
    %501 = vmatprep.subr.mxu0 0.0
    %502 = vmatpush2.msra.mxu0 0.0
    %503 = vmatprep.subr.mxu0 0.0
    %504 = vmatpush2.msra.mxu0 0.0
    %505 = vmatprep.subr.mxu0 0.0
    %506 = vmatpush2.msra.mxu0 0.0
    %507 = vmatprep.subr.mxu0 0.0
    %508 = vmatpush2.msra.mxu0 0.0
    %509 = vmatprep.subr.mxu0 0.0
    %510 = vmatpush2.msra.mxu0 0.0
    %511 = vmatprep.subr.mxu0 0.0
    %512 = vmatpush2.msra.mxu0 0.0
    %513 = vmatprep.subr.mxu0 0.0
    %514 = vmatpush2.msra.mxu0 0.0
    %515 = vmatprep.subr.mxu0 0.0
    %516 = vmatpush2.msra.mxu0 0.0
    %517 = vmatprep.subr.mxu0 0.0
    %518 = vmatpush2.msra.mxu0 0.0
    %519 = vmatprep.subr.mxu0 0.0
    %520 = vmatpush2.msra.mxu0 0.0
    %521 = vmatprep.subr.mxu0 0.0
    %522 = vmatpush2.msra.mxu0 0.0
    %523 = vmatprep.subr.mxu0 0.0
    %524 = vmatpush2.msra.mxu0 0.0
    %525 = vmatprep.subr.mxu0 0.0
    %526 = vmatpush2.msra.mxu0 0.0
    %527 = vmatprep.subr.mxu0 0.0
    %528 = vmatpush2.msra.mxu0 0.0
    %529 = vmatprep.mubr.f32.mxu0 0.0
    %530 = vmatmul.mubr.f32.gmra.mxu0 %v459
    %v531 = vpop.f32.mrf.mxu0
    %v532 = vadd.f32 0.0, %v531
    %v533 = vpop.f32.mrf.mxu0
    %v534 = vadd.f32 0.0, %v533
    %535 = vdwg.mxu0
    %536 = vmatprep.subr.mxu0 %v108
    %537 = vmatpush1.msra.mxu0 %v107
    %538 = vmatprep.subr.mxu0 %v104
    %539 = vmatpush1.msra.mxu0 %v103
    %540 = vmatprep.subr.mxu0 %v100
    %541 = vmatpush1.msra.mxu0 %v99
    %542 = vmatprep.subr.mxu0 %v96
    %543 = vmatpush1.msra.mxu0 %v95
    %544 = vmatprep.subr.mxu0 %v92
    %545 = vmatpush1.msra.mxu0 %v91
    %546 = vmatprep.subr.mxu0 %v88
    %547 = vmatpush1.msra.mxu0 %v87
    %548 = vmatprep.subr.mxu0 %v84
    %549 = vmatpush1.msra.mxu0 %v83
    %550 = vmatprep.subr.mxu0 %v80
    %551 = vmatpush1.msra.mxu0 %v79
    %552 = vmatprep.subr.mxu0 %v76
    %553 = vmatpush1.msra.mxu0 %v75
    %554 = vmatprep.subr.mxu0 %v72
    %555 = vmatpush1.msra.mxu0 %v71
    %556 = vmatprep.subr.mxu0 %v68
    %557 = vmatpush1.msra.mxu0 %v67
    %558 = vmatprep.subr.mxu0 %v64
    %559 = vmatpush1.msra.mxu0 %v63
    %560 = vmatprep.subr.mxu0 %v60
    %561 = vmatpush1.msra.mxu0 %v59
    %562 = vmatprep.subr.mxu0 %v56
    %563 = vmatpush1.msra.mxu0 %v55
    %564 = vmatprep.subr.mxu0 %v52
    %565 = vmatpush1.msra.mxu0 %v51
    %566 = vmatprep.subr.mxu0 %v48
    %567 = vmatpush1.msra.mxu0 %v47
    %568 = vmatprep.subr.mxu0 0.0
    %569 = vmatpush2.msra.mxu0 0.0
    %570 = vmatprep.subr.mxu0 0.0
    %571 = vmatpush2.msra.mxu0 0.0
    %572 = vmatprep.subr.mxu0 0.0
    %573 = vmatpush2.msra.mxu0 0.0
    %574 = vmatprep.subr.mxu0 0.0
    %575 = vmatpush2.msra.mxu0 0.0
    %576 = vmatprep.subr.mxu0 0.0
    %577 = vmatpush2.msra.mxu0 0.0
    %578 = vmatprep.subr.mxu0 0.0
    %579 = vmatpush2.msra.mxu0 0.0
    %580 = vmatprep.subr.mxu0 0.0
    %581 = vmatpush2.msra.mxu0 0.0
    %582 = vmatprep.subr.mxu0 0.0
    %583 = vmatpush2.msra.mxu0 0.0
    %584 = vmatprep.subr.mxu0 0.0
    %585 = vmatpush2.msra.mxu0 0.0
    %586 = vmatprep.subr.mxu0 0.0
    %587 = vmatpush2.msra.mxu0 0.0
    %588 = vmatprep.subr.mxu0 0.0
    %589 = vmatpush2.msra.mxu0 0.0
    %590 = vmatprep.subr.mxu0 0.0
    %591 = vmatpush2.msra.mxu0 0.0
    %592 = vmatprep.subr.mxu0 0.0
    %593 = vmatpush2.msra.mxu0 0.0
    %594 = vmatprep.subr.mxu0 0.0
    %595 = vmatpush2.msra.mxu0 0.0
    %596 = vmatprep.subr.mxu0 0.0
    %597 = vmatpush2.msra.mxu0 0.0
    %598 = vmatprep.subr.mxu0 0.0
    %599 = vmatpush2.msra.mxu0 0.0
    %600 = vmatprep.mubr.f32.mxu0 0.0
    %601 = vmatmul.mubr.f32.gmra.mxu0 %v459
    %v602 = vpop.f32.mrf.mxu0
    %v603 = vadd.f32 0.0, %v602
    %v604 = vpop.f32.mrf.mxu0
    %v605 = vadd.f32 0.0, %v604
    %606 = vdwg.mxu0
    %v607 = vadd.f32 %v461, %v532
    %v608 = vadd.f32 %v462, %v534
    %v609 = vadd.f32 %v463, %v603
    %v610 = vadd.f32 %v464, %v605
    %v611 = vxor.u32 %v607, 2147483648
    %v612 = vxor.u32 %v608, 2147483648
    %v613 = vxor.u32 %v609, 2147483648
    %v614 = vmul.f32 %v611, 1.442695
    %v615 = vpow.pop %v614
    %v616 = vmul.f32 %v612, 1.442695
    %v617 = vpow.pop %v616
    %v618 = vmul.f32 %v613, 1.442695
    %v619 = vpow.pop %v618
    %v620 = vadd.f32 %v615, 1.0
    %v621 = vadd.f32 %v617, 1.0
    %v622 = vadd.f32 %v619, 1.0
    %v623 = vrcp.pop %v620
    %v624 = vmul.f32 1.0, %v623
    %v625 = vrcp.pop %v621
    %v626 = vmul.f32 1.0, %v625
    %v627 = vrcp.pop %v622
    %v628 = vmul.f32 1.0, %v627
    %v629 = vtanh.pop %v610
    %v630 = vmul.f32 %v626, %v457
    %v631 = vmul.f32 %v624, %v629
    %v632 = vadd.f32 %v630, %v631
    %v633 = vtanh.pop %v632
    %v634 = vmul.f32 %v628, %v633
    %s635 = scalar_lea.vmem [#allocation5], 96
    %v636 = vld [vmem:[%s635] sm:$0xff]
    %v637 = vld [vmem:[%s635 + $0x8] sm:$0xff]
    %v638 = vld [vmem:[%s635 + $0x10] sm:$0xff]
    %v639 = vld [vmem:[%s635 + $0x18] sm:$0xff]
    %640 = vmatprep.subr.mxu0 %v106
    %641 = vmatpush1.msra.mxu0 %v105
    %642 = vmatprep.subr.mxu0 %v102
    %643 = vmatpush1.msra.mxu0 %v101
    %644 = vmatprep.subr.mxu0 %v98
    %645 = vmatpush1.msra.mxu0 %v97
    %646 = vmatprep.subr.mxu0 %v94
    %647 = vmatpush1.msra.mxu0 %v93
    %648 = vmatprep.subr.mxu0 %v90
    %649 = vmatpush1.msra.mxu0 %v89
    %650 = vmatprep.subr.mxu0 %v86
    %651 = vmatpush1.msra.mxu0 %v85
    %652 = vmatprep.subr.mxu0 %v82
    %653 = vmatpush1.msra.mxu0 %v81
    %654 = vmatprep.subr.mxu0 %v78
    %655 = vmatpush1.msra.mxu0 %v77
    %656 = vmatprep.subr.mxu0 %v74
    %657 = vmatpush1.msra.mxu0 %v73
    %658 = vmatprep.subr.mxu0 %v70
    %659 = vmatpush1.msra.mxu0 %v69
    %660 = vmatprep.subr.mxu0 %v66
    %661 = vmatpush1.msra.mxu0 %v65
    %662 = vmatprep.subr.mxu0 %v62
    %663 = vmatpush1.msra.mxu0 %v61
    %664 = vmatprep.subr.mxu0 %v58
    %665 = vmatpush1.msra.mxu0 %v57
    %666 = vmatprep.subr.mxu0 %v54
    %667 = vmatpush1.msra.mxu0 %v53
    %668 = vmatprep.subr.mxu0 %v50
    %669 = vmatpush1.msra.mxu0 %v49
    %670 = vmatprep.subr.mxu0 %v46
    %671 = vmatpush1.msra.mxu0 %v45
    %672 = vmatprep.subr.mxu0 0.0
    %673 = vmatpush2.msra.mxu0 0.0
    %674 = vmatprep.subr.mxu0 0.0
    %675 = vmatpush2.msra.mxu0 0.0
    %676 = vmatprep.subr.mxu0 0.0
    %677 = vmatpush2.msra.mxu0 0.0
    %678 = vmatprep.subr.mxu0 0.0
    %679 = vmatpush2.msra.mxu0 0.0
    %680 = vmatprep.subr.mxu0 0.0
    %681 = vmatpush2.msra.mxu0 0.0
    %682 = vmatprep.subr.mxu0 0.0
    %683 = vmatpush2.msra.mxu0 0.0
    %684 = vmatprep.subr.mxu0 0.0
    %685 = vmatpush2.msra.mxu0 0.0
    %686 = vmatprep.subr.mxu0 0.0
    %687 = vmatpush2.msra.mxu0 0.0
    %688 = vmatprep.subr.mxu0 0.0
    %689 = vmatpush2.msra.mxu0 0.0
    %690 = vmatprep.subr.mxu0 0.0
    %691 = vmatpush2.msra.mxu0 0.0
    %692 = vmatprep.subr.mxu0 0.0
    %693 = vmatpush2.msra.mxu0 0.0
    %694 = vmatprep.subr.mxu0 0.0
    %695 = vmatpush2.msra.mxu0 0.0
    %696 = vmatprep.subr.mxu0 0.0
    %697 = vmatpush2.msra.mxu0 0.0
    %698 = vmatprep.subr.mxu0 0.0
    %699 = vmatpush2.msra.mxu0 0.0
    %700 = vmatprep.subr.mxu0 0.0
    %701 = vmatpush2.msra.mxu0 0.0
    %702 = vmatprep.subr.mxu0 0.0
    %703 = vmatpush2.msra.mxu0 0.0
    %704 = vmatprep.mubr.f32.mxu0 0.0
    %705 = vmatmul.mubr.f32.gmra.mxu0 %v634
    %v706 = vpop.f32.mrf.mxu0
    %v707 = vadd.f32 0.0, %v706
    %v708 = vpop.f32.mrf.mxu0
    %v709 = vadd.f32 0.0, %v708
    %710 = vdwg.mxu0
    %711 = vmatprep.subr.mxu0 %v108
    %712 = vmatpush1.msra.mxu0 %v107
    %713 = vmatprep.subr.mxu0 %v104
    %714 = vmatpush1.msra.mxu0 %v103
    %715 = vmatprep.subr.mxu0 %v100
    %716 = vmatpush1.msra.mxu0 %v99
    %717 = vmatprep.subr.mxu0 %v96
    %718 = vmatpush1.msra.mxu0 %v95
    %719 = vmatprep.subr.mxu0 %v92
    %720 = vmatpush1.msra.mxu0 %v91
    %721 = vmatprep.subr.mxu0 %v88
    %722 = vmatpush1.msra.mxu0 %v87
    %723 = vmatprep.subr.mxu0 %v84
    %724 = vmatpush1.msra.mxu0 %v83
    %725 = vmatprep.subr.mxu0 %v80
    %726 = vmatpush1.msra.mxu0 %v79
    %727 = vmatprep.subr.mxu0 %v76
    %728 = vmatpush1.msra.mxu0 %v75
    %729 = vmatprep.subr.mxu0 %v72
    %730 = vmatpush1.msra.mxu0 %v71
    %731 = vmatprep.subr.mxu0 %v68
    %732 = vmatpush1.msra.mxu0 %v67
    %733 = vmatprep.subr.mxu0 %v64
    %734 = vmatpush1.msra.mxu0 %v63
    %735 = vmatprep.subr.mxu0 %v60
    %736 = vmatpush1.msra.mxu0 %v59
    %737 = vmatprep.subr.mxu0 %v56
    %738 = vmatpush1.msra.mxu0 %v55
    %739 = vmatprep.subr.mxu0 %v52
    %740 = vmatpush1.msra.mxu0 %v51
    %741 = vmatprep.subr.mxu0 %v48
    %742 = vmatpush1.msra.mxu0 %v47
    %743 = vmatprep.subr.mxu0 0.0
    %744 = vmatpush2.msra.mxu0 0.0
    %745 = vmatprep.subr.mxu0 0.0
    %746 = vmatpush2.msra.mxu0 0.0
    %747 = vmatprep.subr.mxu0 0.0
    %748 = vmatpush2.msra.mxu0 0.0
    %749 = vmatprep.subr.mxu0 0.0
    %750 = vmatpush2.msra.mxu0 0.0
    %751 = vmatprep.subr.mxu0 0.0
    %752 = vmatpush2.msra.mxu0 0.0
    %753 = vmatprep.subr.mxu0 0.0
    %754 = vmatpush2.msra.mxu0 0.0
    %755 = vmatprep.subr.mxu0 0.0
    %756 = vmatpush2.msra.mxu0 0.0
    %757 = vmatprep.subr.mxu0 0.0
    %758 = vmatpush2.msra.mxu0 0.0
    %759 = vmatprep.subr.mxu0 0.0
    %760 = vmatpush2.msra.mxu0 0.0
    %761 = vmatprep.subr.mxu0 0.0
    %762 = vmatpush2.msra.mxu0 0.0
    %763 = vmatprep.subr.mxu0 0.0
    %764 = vmatpush2.msra.mxu0 0.0
    %765 = vmatprep.subr.mxu0 0.0
    %766 = vmatpush2.msra.mxu0 0.0
    %767 = vmatprep.subr.mxu0 0.0
    %768 = vmatpush2.msra.mxu0 0.0
    %769 = vmatprep.subr.mxu0 0.0
    %770 = vmatpush2.msra.mxu0 0.0
    %771 = vmatprep.subr.mxu0 0.0
    %772 = vmatpush2.msra.mxu0 0.0
    %773 = vmatprep.subr.mxu0 0.0
    %774 = vmatpush2.msra.mxu0 0.0
    %775 = vmatprep.mubr.f32.mxu0 0.0
    %776 = vmatmul.mubr.f32.gmra.mxu0 %v634
    %v777 = vpop.f32.mrf.mxu0
    %v778 = vadd.f32 0.0, %v777
    %v779 = vpop.f32.mrf.mxu0
    %v780 = vadd.f32 0.0, %v779
    %781 = vdwg.mxu0
    %v782 = vadd.f32 %v636, %v707
    %v783 = vadd.f32 %v637, %v709
    %v784 = vadd.f32 %v638, %v778
    %v785 = vadd.f32 %v639, %v780
    %v786 = vxor.u32 %v782, 2147483648
    %v787 = vxor.u32 %v783, 2147483648
    %v788 = vxor.u32 %v784, 2147483648
    %v789 = vmul.f32 %v786, 1.442695
    %v790 = vpow.pop %v789
    %v791 = vmul.f32 %v787, 1.442695
    %v792 = vpow.pop %v791
    %v793 = vmul.f32 %v788, 1.442695
    %v794 = vpow.pop %v793
    %v795 = vadd.f32 %v790, 1.0
    %v796 = vadd.f32 %v792, 1.0
    %v797 = vadd.f32 %v794, 1.0
    %v798 = vrcp.pop %v795
    %v799 = vmul.f32 1.0, %v798
    %v800 = vrcp.pop %v796
    %v801 = vmul.f32 1.0, %v800
    %v802 = vrcp.pop %v797
    %v803 = vmul.f32 1.0, %v802
    %v804 = vtanh.pop %v785
    %v805 = vmul.f32 %v801, %v632
    %v806 = vmul.f32 %v799, %v804
    %v807 = vadd.f32 %v805, %v806
    %v808 = vtanh.pop %v807
    %v809 = vmul.f32 %v803, %v808
    %s810 = scalar_lea.vmem [#allocation5], 128
    %v811 = vld [vmem:[%s810] sm:$0xff]
    %v812 = vld [vmem:[%s810 + $0x8] sm:$0xff]
    %v813 = vld [vmem:[%s810 + $0x10] sm:$0xff]
    %v814 = vld [vmem:[%s810 + $0x18] sm:$0xff]
    %815 = vmatprep.subr.mxu0 %v106
    %816 = vmatpush1.msra.mxu0 %v105
    %817 = vmatprep.subr.mxu0 %v102
    %818 = vmatpush1.msra.mxu0 %v101
    %819 = vmatprep.subr.mxu0 %v98
    %820 = vmatpush1.msra.mxu0 %v97
    %821 = vmatprep.subr.mxu0 %v94
    %822 = vmatpush1.msra.mxu0 %v93
    %823 = vmatprep.subr.mxu0 %v90
    %824 = vmatpush1.msra.mxu0 %v89
    %825 = vmatprep.subr.mxu0 %v86
    %826 = vmatpush1.msra.mxu0 %v85
    %827 = vmatprep.subr.mxu0 %v82
    %828 = vmatpush1.msra.mxu0 %v81
    %829 = vmatprep.subr.mxu0 %v78
    %830 = vmatpush1.msra.mxu0 %v77
    %831 = vmatprep.subr.mxu0 %v74
    %832 = vmatpush1.msra.mxu0 %v73
    %833 = vmatprep.subr.mxu0 %v70
    %834 = vmatpush1.msra.mxu0 %v69
    %835 = vmatprep.subr.mxu0 %v66
    %836 = vmatpush1.msra.mxu0 %v65
    %837 = vmatprep.subr.mxu0 %v62
    %838 = vmatpush1.msra.mxu0 %v61
    %839 = vmatprep.subr.mxu0 %v58
    %840 = vmatpush1.msra.mxu0 %v57
    %841 = vmatprep.subr.mxu0 %v54
    %842 = vmatpush1.msra.mxu0 %v53
    %843 = vmatprep.subr.mxu0 %v50
    %844 = vmatpush1.msra.mxu0 %v49
    %845 = vmatprep.subr.mxu0 %v46
    %846 = vmatpush1.msra.mxu0 %v45
    %847 = vmatprep.subr.mxu0 0.0
    %848 = vmatpush2.msra.mxu0 0.0
    %849 = vmatprep.subr.mxu0 0.0
    %850 = vmatpush2.msra.mxu0 0.0
    %851 = vmatprep.subr.mxu0 0.0
    %852 = vmatpush2.msra.mxu0 0.0
    %853 = vmatprep.subr.mxu0 0.0
    %854 = vmatpush2.msra.mxu0 0.0
    %855 = vmatprep.subr.mxu0 0.0
    %856 = vmatpush2.msra.mxu0 0.0
    %857 = vmatprep.subr.mxu0 0.0
    %858 = vmatpush2.msra.mxu0 0.0
    %859 = vmatprep.subr.mxu0 0.0
    %860 = vmatpush2.msra.mxu0 0.0
    %861 = vmatprep.subr.mxu0 0.0
    %862 = vmatpush2.msra.mxu0 0.0
    %863 = vmatprep.subr.mxu0 0.0
    %864 = vmatpush2.msra.mxu0 0.0
    %865 = vmatprep.subr.mxu0 0.0
    %866 = vmatpush2.msra.mxu0 0.0
    %867 = vmatprep.subr.mxu0 0.0
    %868 = vmatpush2.msra.mxu0 0.0
    %869 = vmatprep.subr.mxu0 0.0
    %870 = vmatpush2.msra.mxu0 0.0
    %871 = vmatprep.subr.mxu0 0.0
    %872 = vmatpush2.msra.mxu0 0.0
    %873 = vmatprep.subr.mxu0 0.0
    %874 = vmatpush2.msra.mxu0 0.0
    %875 = vmatprep.subr.mxu0 0.0
    %876 = vmatpush2.msra.mxu0 0.0
    %877 = vmatprep.subr.mxu0 0.0
    %878 = vmatpush2.msra.mxu0 0.0
    %879 = vmatprep.mubr.f32.mxu0 0.0
    %880 = vmatmul.mubr.f32.gmra.mxu0 %v809
    %v881 = vpop.f32.mrf.mxu0
    %v882 = vadd.f32 0.0, %v881
    %v883 = vpop.f32.mrf.mxu0
    %v884 = vadd.f32 0.0, %v883
    %885 = vdwg.mxu0
    %886 = vmatprep.subr.mxu0 %v108
    %887 = vmatpush1.msra.mxu0 %v107
    %888 = vmatprep.subr.mxu0 %v104
    %889 = vmatpush1.msra.mxu0 %v103
    %890 = vmatprep.subr.mxu0 %v100
    %891 = vmatpush1.msra.mxu0 %v99
    %892 = vmatprep.subr.mxu0 %v96
    %893 = vmatpush1.msra.mxu0 %v95
    %894 = vmatprep.subr.mxu0 %v92
    %895 = vmatpush1.msra.mxu0 %v91
    %896 = vmatprep.subr.mxu0 %v88
    %897 = vmatpush1.msra.mxu0 %v87
    %898 = vmatprep.subr.mxu0 %v84
    %899 = vmatpush1.msra.mxu0 %v83
    %900 = vmatprep.subr.mxu0 %v80
    %901 = vmatpush1.msra.mxu0 %v79
    %902 = vmatprep.subr.mxu0 %v76
    %903 = vmatpush1.msra.mxu0 %v75
    %904 = vmatprep.subr.mxu0 %v72
    %905 = vmatpush1.msra.mxu0 %v71
    %906 = vmatprep.subr.mxu0 %v68
    %907 = vmatpush1.msra.mxu0 %v67
    %908 = vmatprep.subr.mxu0 %v64
    %909 = vmatpush1.msra.mxu0 %v63
    %910 = vmatprep.subr.mxu0 %v60
    %911 = vmatpush1.msra.mxu0 %v59
    %912 = vmatprep.subr.mxu0 %v56
    %913 = vmatpush1.msra.mxu0 %v55
    %914 = vmatprep.subr.mxu0 %v52
    %915 = vmatpush1.msra.mxu0 %v51
    %916 = vmatprep.subr.mxu0 %v48
    %917 = vmatpush1.msra.mxu0 %v47
    %918 = vmatprep.subr.mxu0 0.0
    %919 = vmatpush2.msra.mxu0 0.0
    %920 = vmatprep.subr.mxu0 0.0
    %921 = vmatpush2.msra.mxu0 0.0
    %922 = vmatprep.subr.mxu0 0.0
    %923 = vmatpush2.msra.mxu0 0.0
    %924 = vmatprep.subr.mxu0 0.0
    %925 = vmatpush2.msra.mxu0 0.0
    %926 = vmatprep.subr.mxu0 0.0
    %927 = vmatpush2.msra.mxu0 0.0
    %928 = vmatprep.subr.mxu0 0.0
    %929 = vmatpush2.msra.mxu0 0.0
    %930 = vmatprep.subr.mxu0 0.0
    %931 = vmatpush2.msra.mxu0 0.0
    %932 = vmatprep.subr.mxu0 0.0
    %933 = vmatpush2.msra.mxu0 0.0
    %934 = vmatprep.subr.mxu0 0.0
    %935 = vmatpush2.msra.mxu0 0.0
    %936 = vmatprep.subr.mxu0 0.0
    %937 = vmatpush2.msra.mxu0 0.0
    %938 = vmatprep.subr.mxu0 0.0
    %939 = vmatpush2.msra.mxu0 0.0
    %940 = vmatprep.subr.mxu0 0.0
    %941 = vmatpush2.msra.mxu0 0.0
    %942 = vmatprep.subr.mxu0 0.0
    %943 = vmatpush2.msra.mxu0 0.0
    %944 = vmatprep.subr.mxu0 0.0
    %945 = vmatpush2.msra.mxu0 0.0
    %946 = vmatprep.subr.mxu0 0.0
    %947 = vmatpush2.msra.mxu0 0.0
    %948 = vmatprep.subr.mxu0 0.0
    %949 = vmatpush2.msra.mxu0 0.0
    %950 = vmatprep.mubr.f32.mxu0 0.0
    %951 = vmatmul.mubr.f32.gmra.mxu0 %v809
    %v952 = vpop.f32.mrf.mxu0
    %v953 = vadd.f32 0.0, %v952
    %v954 = vpop.f32.mrf.mxu0
    %v955 = vadd.f32 0.0, %v954
    %956 = vdwg.mxu0
    %v957 = vadd.f32 %v811, %v882
    %v958 = vadd.f32 %v812, %v884
    %v959 = vadd.f32 %v813, %v953
    %v960 = vadd.f32 %v814, %v955
    %v961 = vxor.u32 %v957, 2147483648
    %v962 = vxor.u32 %v958, 2147483648
    %v963 = vxor.u32 %v959, 2147483648
    %v964 = vmul.f32 %v961, 1.442695
    %v965 = vpow.pop %v964
    %v966 = vmul.f32 %v962, 1.442695
    %v967 = vpow.pop %v966
    %v968 = vmul.f32 %v963, 1.442695
    %v969 = vpow.pop %v968
    %v970 = vadd.f32 %v965, 1.0
    %v971 = vadd.f32 %v967, 1.0
    %v972 = vadd.f32 %v969, 1.0
    %v973 = vrcp.pop %v970
    %v974 = vmul.f32 1.0, %v973
    %v975 = vrcp.pop %v971
    %v976 = vmul.f32 1.0, %v975
    %v977 = vrcp.pop %v972
    %v978 = vmul.f32 1.0, %v977
    %v979 = vtanh.pop %v960
    %v980 = vmul.f32 %v976, %v807
    %v981 = vmul.f32 %v974, %v979
    %v982 = vadd.f32 %v980, %v981
    %v983 = vtanh.pop %v982
    %v984 = vmul.f32 %v978, %v983
    %s985 = scalar_lea.vmem [#allocation5], 160
    %v986 = vld [vmem:[%s985] sm:$0xff]
    %v987 = vld [vmem:[%s985 + $0x8] sm:$0xff]
    %v988 = vld [vmem:[%s985 + $0x10] sm:$0xff]
    %v989 = vld [vmem:[%s985 + $0x18] sm:$0xff]
    %990 = vmatprep.subr.mxu0 %v106
    %991 = vmatpush1.msra.mxu0 %v105
    %992 = vmatprep.subr.mxu0 %v102
    %993 = vmatpush1.msra.mxu0 %v101
    %994 = vmatprep.subr.mxu0 %v98
    %995 = vmatpush1.msra.mxu0 %v97
    %996 = vmatprep.subr.mxu0 %v94
    %997 = vmatpush1.msra.mxu0 %v93
    %998 = vmatprep.subr.mxu0 %v90
    %999 = vmatpush1.msra.mxu0 %v89
    %1000 = vmatprep.subr.mxu0 %v86
    %1001 = vmatpush1.msra.mxu0 %v85
    %1002 = vmatprep.subr.mxu0 %v82
    %1003 = vmatpush1.msra.mxu0 %v81
    %1004 = vmatprep.subr.mxu0 %v78
    %1005 = vmatpush1.msra.mxu0 %v77
    %1006 = vmatprep.subr.mxu0 %v74
    %1007 = vmatpush1.msra.mxu0 %v73
    %1008 = vmatprep.subr.mxu0 %v70
    %1009 = vmatpush1.msra.mxu0 %v69
    %1010 = vmatprep.subr.mxu0 %v66
    %1011 = vmatpush1.msra.mxu0 %v65
    %1012 = vmatprep.subr.mxu0 %v62
    %1013 = vmatpush1.msra.mxu0 %v61
    %1014 = vmatprep.subr.mxu0 %v58
    %1015 = vmatpush1.msra.mxu0 %v57
    %1016 = vmatprep.subr.mxu0 %v54
    %1017 = vmatpush1.msra.mxu0 %v53
    %1018 = vmatprep.subr.mxu0 %v50
    %1019 = vmatpush1.msra.mxu0 %v49
    %1020 = vmatprep.subr.mxu0 %v46
    %1021 = vmatpush1.msra.mxu0 %v45
    %1022 = vmatprep.subr.mxu0 0.0
    %1023 = vmatpush2.msra.mxu0 0.0
    %1024 = vmatprep.subr.mxu0 0.0
    %1025 = vmatpush2.msra.mxu0 0.0
    %1026 = vmatprep.subr.mxu0 0.0
    %1027 = vmatpush2.msra.mxu0 0.0
    %1028 = vmatprep.subr.mxu0 0.0
    %1029 = vmatpush2.msra.mxu0 0.0
    %1030 = vmatprep.subr.mxu0 0.0
    %1031 = vmatpush2.msra.mxu0 0.0
    %1032 = vmatprep.subr.mxu0 0.0
    %1033 = vmatpush2.msra.mxu0 0.0
    %1034 = vmatprep.subr.mxu0 0.0
    %1035 = vmatpush2.msra.mxu0 0.0
    %1036 = vmatprep.subr.mxu0 0.0
    %1037 = vmatpush2.msra.mxu0 0.0
    %1038 = vmatprep.subr.mxu0 0.0
    %1039 = vmatpush2.msra.mxu0 0.0
    %1040 = vmatprep.subr.mxu0 0.0
    %1041 = vmatpush2.msra.mxu0 0.0
    %1042 = vmatprep.subr.mxu0 0.0
    %1043 = vmatpush2.msra.mxu0 0.0
    %1044 = vmatprep.subr.mxu0 0.0
    %1045 = vmatpush2.msra.mxu0 0.0
    %1046 = vmatprep.subr.mxu0 0.0
    %1047 = vmatpush2.msra.mxu0 0.0
    %1048 = vmatprep.subr.mxu0 0.0
    %1049 = vmatpush2.msra.mxu0 0.0
    %1050 = vmatprep.subr.mxu0 0.0
    %1051 = vmatpush2.msra.mxu0 0.0
    %1052 = vmatprep.subr.mxu0 0.0
    %1053 = vmatpush2.msra.mxu0 0.0
    %1054 = vmatprep.mubr.f32.mxu0 0.0
    %1055 = vmatmul.mubr.f32.gmra.mxu0 %v984
    %v1056 = vpop.f32.mrf.mxu0
    %v1057 = vadd.f32 0.0, %v1056
    %v1058 = vpop.f32.mrf.mxu0
    %v1059 = vadd.f32 0.0, %v1058
    %1060 = vdwg.mxu0
    %1061 = vmatprep.subr.mxu0 %v108
    %1062 = vmatpush1.msra.mxu0 %v107
    %1063 = vmatprep.subr.mxu0 %v104
    %1064 = vmatpush1.msra.mxu0 %v103
    %1065 = vmatprep.subr.mxu0 %v100
    %1066 = vmatpush1.msra.mxu0 %v99
    %1067 = vmatprep.subr.mxu0 %v96
    %1068 = vmatpush1.msra.mxu0 %v95
    %1069 = vmatprep.subr.mxu0 %v92
    %1070 = vmatpush1.msra.mxu0 %v91
    %1071 = vmatprep.subr.mxu0 %v88
    %1072 = vmatpush1.msra.mxu0 %v87
    %1073 = vmatprep.subr.mxu0 %v84
    %1074 = vmatpush1.msra.mxu0 %v83
    %1075 = vmatprep.subr.mxu0 %v80
    %1076 = vmatpush1.msra.mxu0 %v79
    %1077 = vmatprep.subr.mxu0 %v76
    %1078 = vmatpush1.msra.mxu0 %v75
    %1079 = vmatprep.subr.mxu0 %v72
    %1080 = vmatpush1.msra.mxu0 %v71
    %1081 = vmatprep.subr.mxu0 %v68
    %1082 = vmatpush1.msra.mxu0 %v67
    %1083 = vmatprep.subr.mxu0 %v64
    %1084 = vmatpush1.msra.mxu0 %v63
    %1085 = vmatprep.subr.mxu0 %v60
    %1086 = vmatpush1.msra.mxu0 %v59
    %1087 = vmatprep.subr.mxu0 %v56
    %1088 = vmatpush1.msra.mxu0 %v55
    %1089 = vmatprep.subr.mxu0 %v52
    %1090 = vmatpush1.msra.mxu0 %v51
    %1091 = vmatprep.subr.mxu0 %v48
    %1092 = vmatpush1.msra.mxu0 %v47
    %1093 = vmatprep.subr.mxu0 0.0
    %1094 = vmatpush2.msra.mxu0 0.0
    %1095 = vmatprep.subr.mxu0 0.0
    %1096 = vmatpush2.msra.mxu0 0.0
    %1097 = vmatprep.subr.mxu0 0.0
    %1098 = vmatpush2.msra.mxu0 0.0
    %1099 = vmatprep.subr.mxu0 0.0
    %1100 = vmatpush2.msra.mxu0 0.0
    %1101 = vmatprep.subr.mxu0 0.0
    %1102 = vmatpush2.msra.mxu0 0.0
    %1103 = vmatprep.subr.mxu0 0.0
    %1104 = vmatpush2.msra.mxu0 0.0
    %1105 = vmatprep.subr.mxu0 0.0
    %1106 = vmatpush2.msra.mxu0 0.0
    %1107 = vmatprep.subr.mxu0 0.0
    %1108 = vmatpush2.msra.mxu0 0.0
    %1109 = vmatprep.subr.mxu0 0.0
    %1110 = vmatpush2.msra.mxu0 0.0
    %1111 = vmatprep.subr.mxu0 0.0
    %1112 = vmatpush2.msra.mxu0 0.0
    %1113 = vmatprep.subr.mxu0 0.0
    %1114 = vmatpush2.msra.mxu0 0.0
    %1115 = vmatprep.subr.mxu0 0.0
    %1116 = vmatpush2.msra.mxu0 0.0
    %1117 = vmatprep.subr.mxu0 0.0
    %1118 = vmatpush2.msra.mxu0 0.0
    %1119 = vmatprep.subr.mxu0 0.0
    %1120 = vmatpush2.msra.mxu0 0.0
    %1121 = vmatprep.subr.mxu0 0.0
    %1122 = vmatpush2.msra.mxu0 0.0
    %1123 = vmatprep.subr.mxu0 0.0
    %1124 = vmatpush2.msra.mxu0 0.0
    %1125 = vmatprep.mubr.f32.mxu0 0.0
    %1126 = vmatmul.mubr.f32.gmra.mxu0 %v984
    %v1127 = vpop.f32.mrf.mxu0
    %v1128 = vadd.f32 0.0, %v1127
    %v1129 = vpop.f32.mrf.mxu0
    %v1130 = vadd.f32 0.0, %v1129
    %1131 = vdwg.mxu0
    %v1132 = vadd.f32 %v986, %v1057
    %v1133 = vadd.f32 %v987, %v1059
    %v1134 = vadd.f32 %v988, %v1128
    %v1135 = vadd.f32 %v989, %v1130
    %v1136 = vxor.u32 %v1132, 2147483648
    %v1137 = vxor.u32 %v1133, 2147483648
    %v1138 = vxor.u32 %v1134, 2147483648
    %v1139 = vmul.f32 %v1136, 1.442695
    %v1140 = vpow.pop %v1139
    %v1141 = vmul.f32 %v1137, 1.442695
    %v1142 = vpow.pop %v1141
    %v1143 = vmul.f32 %v1138, 1.442695
    %v1144 = vpow.pop %v1143
    %v1145 = vadd.f32 %v1140, 1.0
    %v1146 = vadd.f32 %v1142, 1.0
    %v1147 = vadd.f32 %v1144, 1.0
    %v1148 = vrcp.pop %v1145
    %v1149 = vmul.f32 1.0, %v1148
    %v1150 = vrcp.pop %v1146
    %v1151 = vmul.f32 1.0, %v1150
    %v1152 = vrcp.pop %v1147
    %v1153 = vmul.f32 1.0, %v1152
    %v1154 = vtanh.pop %v1135
    %v1155 = vmul.f32 %v1151, %v982
    %v1156 = vmul.f32 %v1149, %v1154
    %v1157 = vadd.f32 %v1155, %v1156
    %v1158 = vtanh.pop %v1157
    %v1159 = vmul.f32 %v1153, %v1158
    %s1160 = scalar_lea.vmem [#allocation5], 192
    %v1161 = vld [vmem:[%s1160] sm:$0xff]
    %v1162 = vld [vmem:[%s1160 + $0x8] sm:$0xff]
    %v1163 = vld [vmem:[%s1160 + $0x10] sm:$0xff]
    %v1164 = vld [vmem:[%s1160 + $0x18] sm:$0xff]
    %1165 = vmatprep.subr.mxu0 %v106
    %1166 = vmatpush1.msra.mxu0 %v105
    %1167 = vmatprep.subr.mxu0 %v102
    %1168 = vmatpush1.msra.mxu0 %v101
    %1169 = vmatprep.subr.mxu0 %v98
    %1170 = vmatpush1.msra.mxu0 %v97
    %1171 = vmatprep.subr.mxu0 %v94
    %1172 = vmatpush1.msra.mxu0 %v93
    %1173 = vmatprep.subr.mxu0 %v90
    %1174 = vmatpush1.msra.mxu0 %v89
    %1175 = vmatprep.subr.mxu0 %v86
    %1176 = vmatpush1.msra.mxu0 %v85
    %1177 = vmatprep.subr.mxu0 %v82
    %1178 = vmatpush1.msra.mxu0 %v81
    %1179 = vmatprep.subr.mxu0 %v78
    %1180 = vmatpush1.msra.mxu0 %v77
    %1181 = vmatprep.subr.mxu0 %v74
    %1182 = vmatpush1.msra.mxu0 %v73
    %1183 = vmatprep.subr.mxu0 %v70
    %1184 = vmatpush1.msra.mxu0 %v69
    %1185 = vmatprep.subr.mxu0 %v66
    %1186 = vmatpush1.msra.mxu0 %v65
    %1187 = vmatprep.subr.mxu0 %v62
    %1188 = vmatpush1.msra.mxu0 %v61
    %1189 = vmatprep.subr.mxu0 %v58
    %1190 = vmatpush1.msra.mxu0 %v57
    %1191 = vmatprep.subr.mxu0 %v54
    %1192 = vmatpush1.msra.mxu0 %v53
    %1193 = vmatprep.subr.mxu0 %v50
    %1194 = vmatpush1.msra.mxu0 %v49
    %1195 = vmatprep.subr.mxu0 %v46
    %1196 = vmatpush1.msra.mxu0 %v45
    %1197 = vmatprep.subr.mxu0 0.0
    %1198 = vmatpush2.msra.mxu0 0.0
    %1199 = vmatprep.subr.mxu0 0.0
    %1200 = vmatpush2.msra.mxu0 0.0
    %1201 = vmatprep.subr.mxu0 0.0
    %1202 = vmatpush2.msra.mxu0 0.0
    %1203 = vmatprep.subr.mxu0 0.0
    %1204 = vmatpush2.msra.mxu0 0.0
    %1205 = vmatprep.subr.mxu0 0.0
    %1206 = vmatpush2.msra.mxu0 0.0
    %1207 = vmatprep.subr.mxu0 0.0
    %1208 = vmatpush2.msra.mxu0 0.0
    %1209 = vmatprep.subr.mxu0 0.0
    %1210 = vmatpush2.msra.mxu0 0.0
    %1211 = vmatprep.subr.mxu0 0.0
    %1212 = vmatpush2.msra.mxu0 0.0
    %1213 = vmatprep.subr.mxu0 0.0
    %1214 = vmatpush2.msra.mxu0 0.0
    %1215 = vmatprep.subr.mxu0 0.0
    %1216 = vmatpush2.msra.mxu0 0.0
    %1217 = vmatprep.subr.mxu0 0.0
    %1218 = vmatpush2.msra.mxu0 0.0
    %1219 = vmatprep.subr.mxu0 0.0
    %1220 = vmatpush2.msra.mxu0 0.0
    %1221 = vmatprep.subr.mxu0 0.0
    %1222 = vmatpush2.msra.mxu0 0.0
    %1223 = vmatprep.subr.mxu0 0.0
    %1224 = vmatpush2.msra.mxu0 0.0
    %1225 = vmatprep.subr.mxu0 0.0
    %1226 = vmatpush2.msra.mxu0 0.0
    %1227 = vmatprep.subr.mxu0 0.0
    %1228 = vmatpush2.msra.mxu0 0.0
    %1229 = vmatprep.mubr.f32.mxu0 0.0
    %1230 = vmatmul.mubr.f32.gmra.mxu0 %v1159
    %v1231 = vpop.f32.mrf.mxu0
    %v1232 = vadd.f32 0.0, %v1231
    %v1233 = vpop.f32.mrf.mxu0
    %v1234 = vadd.f32 0.0, %v1233
    %1235 = vdwg.mxu0
    %1236 = vmatprep.subr.mxu0 %v108
    %1237 = vmatpush1.msra.mxu0 %v107
    %1238 = vmatprep.subr.mxu0 %v104
    %1239 = vmatpush1.msra.mxu0 %v103
    %1240 = vmatprep.subr.mxu0 %v100
    %1241 = vmatpush1.msra.mxu0 %v99
    %1242 = vmatprep.subr.mxu0 %v96
    %1243 = vmatpush1.msra.mxu0 %v95
    %1244 = vmatprep.subr.mxu0 %v92
    %1245 = vmatpush1.msra.mxu0 %v91
    %1246 = vmatprep.subr.mxu0 %v88
    %1247 = vmatpush1.msra.mxu0 %v87
    %1248 = vmatprep.subr.mxu0 %v84
    %1249 = vmatpush1.msra.mxu0 %v83
    %1250 = vmatprep.subr.mxu0 %v80
    %1251 = vmatpush1.msra.mxu0 %v79
    %1252 = vmatprep.subr.mxu0 %v76
    %1253 = vmatpush1.msra.mxu0 %v75
    %1254 = vmatprep.subr.mxu0 %v72
    %1255 = vmatpush1.msra.mxu0 %v71
    %1256 = vmatprep.subr.mxu0 %v68
    %1257 = vmatpush1.msra.mxu0 %v67
    %1258 = vmatprep.subr.mxu0 %v64
    %1259 = vmatpush1.msra.mxu0 %v63
    %1260 = vmatprep.subr.mxu0 %v60
    %1261 = vmatpush1.msra.mxu0 %v59
    %1262 = vmatprep.subr.mxu0 %v56
    %1263 = vmatpush1.msra.mxu0 %v55
    %1264 = vmatprep.subr.mxu0 %v52
    %1265 = vmatpush1.msra.mxu0 %v51
    %1266 = vmatprep.subr.mxu0 %v48
    %1267 = vmatpush1.msra.mxu0 %v47
    %1268 = vmatprep.subr.mxu0 0.0
    %1269 = vmatpush2.msra.mxu0 0.0
    %1270 = vmatprep.subr.mxu0 0.0
    %1271 = vmatpush2.msra.mxu0 0.0
    %1272 = vmatprep.subr.mxu0 0.0
    %1273 = vmatpush2.msra.mxu0 0.0
    %1274 = vmatprep.subr.mxu0 0.0
    %1275 = vmatpush2.msra.mxu0 0.0
    %1276 = vmatprep.subr.mxu0 0.0
    %1277 = vmatpush2.msra.mxu0 0.0
    %1278 = vmatprep.subr.mxu0 0.0
    %1279 = vmatpush2.msra.mxu0 0.0
    %1280 = vmatprep.subr.mxu0 0.0
    %1281 = vmatpush2.msra.mxu0 0.0
    %1282 = vmatprep.subr.mxu0 0.0
    %1283 = vmatpush2.msra.mxu0 0.0
    %1284 = vmatprep.subr.mxu0 0.0
    %1285 = vmatpush2.msra.mxu0 0.0
    %1286 = vmatprep.subr.mxu0 0.0
    %1287 = vmatpush2.msra.mxu0 0.0
    %1288 = vmatprep.subr.mxu0 0.0
    %1289 = vmatpush2.msra.mxu0 0.0
    %1290 = vmatprep.subr.mxu0 0.0
    %1291 = vmatpush2.msra.mxu0 0.0
    %1292 = vmatprep.subr.mxu0 0.0
    %1293 = vmatpush2.msra.mxu0 0.0
    %1294 = vmatprep.subr.mxu0 0.0
    %1295 = vmatpush2.msra.mxu0 0.0
    %1296 = vmatprep.subr.mxu0 0.0
    %1297 = vmatpush2.msra.mxu0 0.0
    %1298 = vmatprep.subr.mxu0 0.0
    %1299 = vmatpush2.msra.mxu0 0.0
    %1300 = vmatprep.mubr.f32.mxu0 0.0
    %1301 = vmatmul.mubr.f32.gmra.mxu0 %v1159
    %v1302 = vpop.f32.mrf.mxu0
    %v1303 = vadd.f32 0.0, %v1302
    %v1304 = vpop.f32.mrf.mxu0
    %v1305 = vadd.f32 0.0, %v1304
    %1306 = vdwg.mxu0
    %v1307 = vadd.f32 %v1161, %v1232
    %v1308 = vadd.f32 %v1162, %v1234
    %v1309 = vadd.f32 %v1163, %v1303
    %v1310 = vadd.f32 %v1164, %v1305
    %v1311 = vxor.u32 %v1307, 2147483648
    %v1312 = vxor.u32 %v1308, 2147483648
    %v1313 = vxor.u32 %v1309, 2147483648
    %v1314 = vmul.f32 %v1311, 1.442695
    %v1315 = vpow.pop %v1314
    %v1316 = vmul.f32 %v1312, 1.442695
    %v1317 = vpow.pop %v1316
    %v1318 = vmul.f32 %v1313, 1.442695
    %v1319 = vpow.pop %v1318
    %v1320 = vadd.f32 %v1315, 1.0
    %v1321 = vadd.f32 %v1317, 1.0
    %v1322 = vadd.f32 %v1319, 1.0
    %v1323 = vrcp.pop %v1320
    %v1324 = vmul.f32 1.0, %v1323
    %v1325 = vrcp.pop %v1321
    %v1326 = vmul.f32 1.0, %v1325
    %v1327 = vrcp.pop %v1322
    %v1328 = vmul.f32 1.0, %v1327
    %v1329 = vtanh.pop %v1310
    %v1330 = vmul.f32 %v1326, %v1157
    %v1331 = vmul.f32 %v1324, %v1329
    %v1332 = vadd.f32 %v1330, %v1331
    %v1333 = vtanh.pop %v1332
    %v1334 = vmul.f32 %v1328, %v1333
    %s1335 = scalar_lea.vmem [#allocation5], 224
    %v1336 = vld [vmem:[%s1335] sm:$0xff]
    %v1337 = vld [vmem:[%s1335 + $0x8] sm:$0xff]
    %v1338 = vld [vmem:[%s1335 + $0x10] sm:$0xff]
    %v1339 = vld [vmem:[%s1335 + $0x18] sm:$0xff]
    %1340 = vmatprep.subr.mxu0 %v106
    %1341 = vmatpush1.msra.mxu0 %v105
    %1342 = vmatprep.subr.mxu0 %v102
    %1343 = vmatpush1.msra.mxu0 %v101
    %1344 = vmatprep.subr.mxu0 %v98
    %1345 = vmatpush1.msra.mxu0 %v97
    %1346 = vmatprep.subr.mxu0 %v94
    %1347 = vmatpush1.msra.mxu0 %v93
    %1348 = vmatprep.subr.mxu0 %v90
    %1349 = vmatpush1.msra.mxu0 %v89
    %1350 = vmatprep.subr.mxu0 %v86
    %1351 = vmatpush1.msra.mxu0 %v85
    %1352 = vmatprep.subr.mxu0 %v82
    %1353 = vmatpush1.msra.mxu0 %v81
    %1354 = vmatprep.subr.mxu0 %v78
    %1355 = vmatpush1.msra.mxu0 %v77
    %1356 = vmatprep.subr.mxu0 %v74
    %1357 = vmatpush1.msra.mxu0 %v73
    %1358 = vmatprep.subr.mxu0 %v70
    %1359 = vmatpush1.msra.mxu0 %v69
    %1360 = vmatprep.subr.mxu0 %v66
    %1361 = vmatpush1.msra.mxu0 %v65
    %1362 = vmatprep.subr.mxu0 %v62
    %1363 = vmatpush1.msra.mxu0 %v61
    %1364 = vmatprep.subr.mxu0 %v58
    %1365 = vmatpush1.msra.mxu0 %v57
    %1366 = vmatprep.subr.mxu0 %v54
    %1367 = vmatpush1.msra.mxu0 %v53
    %1368 = vmatprep.subr.mxu0 %v50
    %1369 = vmatpush1.msra.mxu0 %v49
    %1370 = vmatprep.subr.mxu0 %v46
    %1371 = vmatpush1.msra.mxu0 %v45
    %1372 = vmatprep.subr.mxu0 0.0
    %1373 = vmatpush2.msra.mxu0 0.0
    %1374 = vmatprep.subr.mxu0 0.0
    %1375 = vmatpush2.msra.mxu0 0.0
    %1376 = vmatprep.subr.mxu0 0.0
    %1377 = vmatpush2.msra.mxu0 0.0
    %1378 = vmatprep.subr.mxu0 0.0
    %1379 = vmatpush2.msra.mxu0 0.0
    %1380 = vmatprep.subr.mxu0 0.0
    %1381 = vmatpush2.msra.mxu0 0.0
    %1382 = vmatprep.subr.mxu0 0.0
    %1383 = vmatpush2.msra.mxu0 0.0
    %1384 = vmatprep.subr.mxu0 0.0
    %1385 = vmatpush2.msra.mxu0 0.0
    %1386 = vmatprep.subr.mxu0 0.0
    %1387 = vmatpush2.msra.mxu0 0.0
    %1388 = vmatprep.subr.mxu0 0.0
    %1389 = vmatpush2.msra.mxu0 0.0
    %1390 = vmatprep.subr.mxu0 0.0
    %1391 = vmatpush2.msra.mxu0 0.0
    %1392 = vmatprep.subr.mxu0 0.0
    %1393 = vmatpush2.msra.mxu0 0.0
    %1394 = vmatprep.subr.mxu0 0.0
    %1395 = vmatpush2.msra.mxu0 0.0
    %1396 = vmatprep.subr.mxu0 0.0
    %1397 = vmatpush2.msra.mxu0 0.0
    %1398 = vmatprep.subr.mxu0 0.0
    %1399 = vmatpush2.msra.mxu0 0.0
    %1400 = vmatprep.subr.mxu0 0.0
    %1401 = vmatpush2.msra.mxu0 0.0
    %1402 = vmatprep.subr.mxu0 0.0
    %1403 = vmatpush2.msra.mxu0 0.0
    %1404 = vmatprep.mubr.f32.mxu0 0.0
    %1405 = vmatmul.mubr.f32.gmra.mxu0 %v1334
    %v1406 = vpop.f32.mrf.mxu0
    %v1407 = vadd.f32 0.0, %v1406
    %v1408 = vpop.f32.mrf.mxu0
    %v1409 = vadd.f32 0.0, %v1408
    %1410 = vdwg.mxu0
    %1411 = vmatprep.subr.mxu0 %v108
    %1412 = vmatpush1.msra.mxu0 %v107
    %1413 = vmatprep.subr.mxu0 %v104
    %1414 = vmatpush1.msra.mxu0 %v103
    %1415 = vmatprep.subr.mxu0 %v100
    %1416 = vmatpush1.msra.mxu0 %v99
    %1417 = vmatprep.subr.mxu0 %v96
    %1418 = vmatpush1.msra.mxu0 %v95
    %1419 = vmatprep.subr.mxu0 %v92
    %1420 = vmatpush1.msra.mxu0 %v91
    %1421 = vmatprep.subr.mxu0 %v88
    %1422 = vmatpush1.msra.mxu0 %v87
    %1423 = vmatprep.subr.mxu0 %v84
    %1424 = vmatpush1.msra.mxu0 %v83
    %1425 = vmatprep.subr.mxu0 %v80
    %1426 = vmatpush1.msra.mxu0 %v79
    %1427 = vmatprep.subr.mxu0 %v76
    %1428 = vmatpush1.msra.mxu0 %v75
    %1429 = vmatprep.subr.mxu0 %v72
    %1430 = vmatpush1.msra.mxu0 %v71
    %1431 = vmatprep.subr.mxu0 %v68
    %1432 = vmatpush1.msra.mxu0 %v67
    %1433 = vmatprep.subr.mxu0 %v64
    %1434 = vmatpush1.msra.mxu0 %v63
    %1435 = vmatprep.subr.mxu0 %v60
    %1436 = vmatpush1.msra.mxu0 %v59
    %1437 = vmatprep.subr.mxu0 %v56
    %1438 = vmatpush1.msra.mxu0 %v55
    %1439 = vmatprep.subr.mxu0 %v52
    %1440 = vmatpush1.msra.mxu0 %v51
    %1441 = vmatprep.subr.mxu0 %v48
    %1442 = vmatpush1.msra.mxu0 %v47
    %1443 = vmatprep.subr.mxu0 0.0
    %1444 = vmatpush2.msra.mxu0 0.0
    %1445 = vmatprep.subr.mxu0 0.0
    %1446 = vmatpush2.msra.mxu0 0.0
    %1447 = vmatprep.subr.mxu0 0.0
    %1448 = vmatpush2.msra.mxu0 0.0
    %1449 = vmatprep.subr.mxu0 0.0
    %1450 = vmatpush2.msra.mxu0 0.0
    %1451 = vmatprep.subr.mxu0 0.0
    %1452 = vmatpush2.msra.mxu0 0.0
    %1453 = vmatprep.subr.mxu0 0.0
    %1454 = vmatpush2.msra.mxu0 0.0
    %1455 = vmatprep.subr.mxu0 0.0
    %1456 = vmatpush2.msra.mxu0 0.0
    %1457 = vmatprep.subr.mxu0 0.0
    %1458 = vmatpush2.msra.mxu0 0.0
    %1459 = vmatprep.subr.mxu0 0.0
    %1460 = vmatpush2.msra.mxu0 0.0
    %1461 = vmatprep.subr.mxu0 0.0
    %1462 = vmatpush2.msra.mxu0 0.0
    %1463 = vmatprep.subr.mxu0 0.0
    %1464 = vmatpush2.msra.mxu0 0.0
    %1465 = vmatprep.subr.mxu0 0.0
    %1466 = vmatpush2.msra.mxu0 0.0
    %1467 = vmatprep.subr.mxu0 0.0
    %1468 = vmatpush2.msra.mxu0 0.0
    %1469 = vmatprep.subr.mxu0 0.0
    %1470 = vmatpush2.msra.mxu0 0.0
    %1471 = vmatprep.subr.mxu0 0.0
    %1472 = vmatpush2.msra.mxu0 0.0
    %1473 = vmatprep.subr.mxu0 0.0
    %1474 = vmatpush2.msra.mxu0 0.0
    %1475 = vmatprep.mubr.f32.mxu0 0.0
    %1476 = vmatmul.mubr.f32.gmra.mxu0 %v1334
    %v1477 = vpop.f32.mrf.mxu0
    %v1478 = vadd.f32 0.0, %v1477
    %v1479 = vpop.f32.mrf.mxu0
    %v1480 = vadd.f32 0.0, %v1479
    %1481 = vdwg.mxu0
    %v1482 = vadd.f32 %v1336, %v1407
    %v1483 = vadd.f32 %v1337, %v1409
    %v1484 = vadd.f32 %v1338, %v1478
    %v1485 = vadd.f32 %v1339, %v1480
    %v1486 = vxor.u32 %v1482, 2147483648
    %v1487 = vxor.u32 %v1483, 2147483648
    %v1488 = vxor.u32 %v1484, 2147483648
    %v1489 = vmul.f32 %v1486, 1.442695
    %v1490 = vpow.pop %v1489
    %v1491 = vmul.f32 %v1487, 1.442695
    %v1492 = vpow.pop %v1491
    %v1493 = vmul.f32 %v1488, 1.442695
    %v1494 = vpow.pop %v1493
    %v1495 = vadd.f32 %v1490, 1.0
    %v1496 = vadd.f32 %v1492, 1.0
    %v1497 = vadd.f32 %v1494, 1.0
    %v1498 = vrcp.pop %v1495
    %v1499 = vmul.f32 1.0, %v1498
    %v1500 = vrcp.pop %v1496
    %v1501 = vmul.f32 1.0, %v1500
    %v1502 = vrcp.pop %v1497
    %v1503 = vmul.f32 1.0, %v1502
    %v1504 = vtanh.pop %v1485
    %v1505 = vmul.f32 %v1501, %v1332
    %v1506 = vmul.f32 %v1499, %v1504
    %v1507 = vadd.f32 %v1505, %v1506
    %v1508 = vtanh.pop %v1507
    %v1509 = vmul.f32 %v1503, %v1508
    %1510 = vst [vmem:[#allocation8] sm:$0xff] %v1509
    %1511 = vst [vmem:[#allocation3] sm:$0xff] %v1507
    // Predicated region
    $region18: #{tpu_custom_call.1} parent=1 // pred_check
      _
    $region19: #{tpu_custom_call.1} parent=1 // pred_check_branch
      %1513 = sbr.rel (0) target = $region21
    $region20: #{tpu_custom_call.1} parent=1 // pred_region
      %s1515 = ssub.s32 128, 128
      %1516 = vsyncadd [#allocation7], %s1515
      %s1518 = sshll.u32 [#allocation8], 4
      %s1519 = int_to_ptr.vmem [resolvable:$true] %s1518
      %1521 = dma.vmem_to_hbm [thread:$0]  %s1519, 128, %s2, [#allocation7]
    $region21: #{tpu_custom_call.1} parent=1 // pred_fallthru
      _
    // Predicated region
    $region22: #{tpu_custom_call.1} parent=1 // pred_check
      _
    $region23: #{tpu_custom_call.1} parent=1 // pred_check_branch
      %1523 = sbr.rel (0) target = $region25
    $region24: #{tpu_custom_call.1} parent=1 // pred_region
      %1524 = dma.done [#allocation7], 128
    $region25: #{tpu_custom_call.1} parent=1 // pred_fallthru
      _
    %1525 = vsyncpa [#allocation6], 1
    %1526 = vsyncpa [#allocation7], 1
  %1527 = vsyncmov [#allocation4]
  %s1528 = vpop.sfrf %1527
  %p1529 = scmp.eq.s32.totalorder %s1528, 0
  %p1530 = pneg %p1529
  %1532 = shalt.err (%p1530)

</llo_original>
